<compile_context>
chip_gen: v6e
topology: v6e:2x2x1
jax: 0.10.0
libtpu: 0.0.40
codegen_flags: <defaults>
</compile_context>

<pallas_src>
import functools
import math

import jax
import jax.numpy as jnp
import numpy as np
from jax import lax
from jax.experimental import pallas as pl
from jax.experimental.pallas import tpu as pltpu


# ----------------------------------------------------------------------------
# Kernel: one batch block per grid step; projections + dual attention + W_o
# epilogue fused.  All heads and all Bb batch rows handled inside the step.
# ----------------------------------------------------------------------------
def _fused_mha_kernel(num_heads, batch_block,
                      vlen_ref,                       # SMEM (B,) int32 (scalar prefetch)
                      q_ref, k_ref, v_ref,            # (Bb,Lq,qs), (Bb,Lk,ks), (Bb,Lk,vs)
                      wq_ref, wkv_ref, wo_ref,        # (H,qs), (2H,ks+vs), (H,H)
                      out_ref,                        # (Bb, Lq, H)
                      w_ref):                         # (Bb, Lq, heads*Lk)  lane-dense slab
    step = pl.program_id(0)

    Bb, Lq, qs = q_ref.shape
    _, Lk, ks = k_ref.shape
    vs = v_ref.shape[2]
    H = wq_ref.shape[0]
    d = H // num_heads

    # x @ W.T for nn.Linear-shaped (Out, In) weights: contract last dims of both.
    dn = (((1,), (1,)), ((), ()))

    # ---- fused projections: fat matmuls over the whole batch block ----------
    q2 = q_ref[...].reshape(Bb * Lq, qs)                                # (Bb*Lq, qs)
    kv2 = jnp.concatenate(
        [k_ref[...].reshape(Bb * Lk, ks), v_ref[...].reshape(Bb * Lk, vs)],
        axis=-1)                                                        # (Bb*Lk, ks+vs)

    Q = lax.dot_general(q2, wq_ref[...], dn,
                        preferred_element_type=jnp.float32)             # (Bb*Lq, H)
    KV = lax.dot_general(kv2, wkv_ref[...], dn,
                         preferred_element_type=jnp.float32)            # (Bb*Lk, 2H)

    # 1/sqrt(d) hoisted onto Q once (single (Bb*Lq,H) mul instead of per-head divides).
    Q = Q * jnp.float32(1.0 / math.sqrt(d))

    q_iota = lax.broadcasted_iota(jnp.int32, (Lq, 1), 0)                # (Lq, 1) column
    neg_big = jnp.float32(-1000000.0)
    wo = wo_ref[...]                                                    # (H, H)

    for b in range(batch_block):                     # static unroll (Bb small)
        # Query-axis ("dual") mask: query positions >= valid_len -> -1e6,
        # shared by every head / key column of this batch element.
        vl = vlen_ref[step * batch_block + b]
        qmask = q_iota < vl                                             # (Lq, 1)

        Qb = Q[b * Lq:(b + 1) * Lq, :]                                  # (Lq, H)
        KVb = KV[b * Lk:(b + 1) * Lk, :]                                # (Lk, 2H)

        acc = jnp.zeros((Lq, H), dtype=jnp.float32)   # single f32 accumulator
        w_blocks = []
        for h in range(num_heads):                   # static unroll (num_heads small)
            lo, hi = h * d, (h + 1) * d
            qh = Qb[:, lo:hi]                        # (Lq, d)
            kh = KVb[:, lo:hi]                       # (Lk, d)
            vh = KVb[:, H + lo:H + hi]               # (Lk, d)

            # scores = (Q/sqrt(d)) K^T, contracting the feature dim directly (no .T)
            s = lax.dot_general(qh, kh, dn,
                                preferred_element_type=jnp.float32)     # (Lq, Lk)
            masked = jnp.where(qmask, s, neg_big)

            # Softmax over the *query* axis (axis 0) — the "dual" attention.
            m = jnp.max(masked, axis=0, keepdims=True)
            e = jnp.exp(masked - m)
            denom = jnp.sum(e, axis=0, keepdims=True)
            # approx=False keeps the 1e-5 tolerance; approx=True would move the
            # divide onto the otherwise-idle EUP slot.
            w = e * pl.reciprocal(denom, approx=False)                  # (Lq, Lk)
            w_blocks.append(w)

            # Fold W_o into a per-head K-accumulation (no head-output concat).
            head_out = jnp.dot(w, vh, preferred_element_type=jnp.float32)  # (Lq, d)
            acc = acc + lax.dot_general(head_out, wo[:, lo:hi], dn,
                                        preferred_element_type=jnp.float32)  # (Lq, H)

        # Lane-dense stores: one (Lq, heads*Lk) slab and one (Lq, H) row per batch row.
        w_ref[b] = jnp.concatenate(w_blocks, axis=-1).astype(w_ref.dtype)
        out_ref[b] = acc.astype(out_ref.dtype)


def _pick_batch_block(B, target=8):
    """Largest divisor of B that is <= target while keeping >=2 grid steps
    (so both v7x TensorCores get work)."""
    divs = [dd for dd in range(1, min(B, target) + 1) if B % dd == 0]
    good = [dd for dd in divs if B // dd >= 2]
    return max(good) if good else max(divs)


def cross_multihead_attention_d(q, k, v, valid_lens, params, num_heads,
                                batch_block=None):
    """Forward pass of cross_MultiHeadAttention_D.

    Returns (attn_output: (B, Lq, H), attn_w: (B*heads, Lq, Lk)).
    """
    B, Lq, q_size = q.shape
    Lk, k_size = k.shape[1], k.shape[2]
    v_size = v.shape[2]
    H = params["W_q"].shape[0]

    if valid_lens is None:
        vlen = jnp.full((B,), Lq, dtype=jnp.int32)     # no masking == all queries valid
    else:
        vlen = valid_lens.astype(jnp.int32)            # per-batch; identical across heads

    if batch_block is None:
        batch_block = _pick_batch_block(B)
    assert B % batch_block == 0
    grid_b = B // batch_block

    # Block-diagonal stack of W_k / W_v -> a single [K | V] projection matmul.
    W_kv = jnp.zeros((2 * H, k_size + v_size), dtype=jnp.float32)
    W_kv = W_kv.at[:H, :k_size].set(params["W_k"].astype(jnp.float32))
    W_kv = W_kv.at[H:, k_size:].set(params["W_v"].astype(jnp.float32))

    kernel = functools.partial(_fused_mha_kernel, num_heads, batch_block)

    grid_spec = pltpu.PrefetchScalarGridSpec(
        num_scalar_prefetch=1,
        grid=(grid_b,),
        in_specs=[
            # activations: one batch block per step
            pl.BlockSpec((batch_block, Lq, q_size), lambda i, vl: (i, 0, 0)),
            pl.BlockSpec((batch_block, Lk, k_size), lambda i, vl: (i, 0, 0)),
            pl.BlockSpec((batch_block, Lk, v_size), lambda i, vl: (i, 0, 0)),
            # weights: full-extent blocks, constant index -> fetched once, reused
            pl.BlockSpec((H, q_size), lambda i, vl: (0, 0)),
            pl.BlockSpec((2 * H, k_size + v_size), lambda i, vl: (0, 0)),
            pl.BlockSpec((H, H), lambda i, vl: (0, 0)),
        ],
        out_specs=[
            pl.BlockSpec((batch_block, Lq, H), lambda i, vl: (i, 0, 0)),
            # lane-dense attn_w slab: last dim = heads*Lk
            pl.BlockSpec((batch_block, Lq, num_heads * Lk), lambda i, vl: (i, 0, 0)),
        ],
    )
    out_shapes = (
        jax.ShapeDtypeStruct((B, Lq, H), jnp.float32),
        jax.ShapeDtypeStruct((B, Lq, num_heads * Lk), jnp.float32),
    )

    attn_output, attn_w_slab = pl.pallas_call(
        kernel,
        grid_spec=grid_spec,
        out_shape=out_shapes,
        compiler_params=pltpu.CompilerParams(
            dimension_semantics=("parallel",)),   # batch-block axis independent -> megacore
    )(vlen, q, k, v, params["W_q"], W_kv, params["W_o"])

    # (B, Lq, heads*Lk) -> (B*heads, Lq, Lk): layout plumbing in the wrapper,
    # keeping the kernel-side stores lane-dense.
    attn_w = attn_w_slab.reshape(B, Lq, num_heads, Lk)
    attn_w = jnp.transpose(attn_w, (0, 2, 1, 3)).reshape(B * num_heads, Lq, Lk)
    return attn_output, attn_w


# ----------------------------------------------------------------------------
# Pure-JAX reference (mirrors the PyTorch module) for the correctness check.
# ----------------------------------------------------------------------------
def _transpose_qkv(X, num_heads):
    B, L, Hh = X.shape
    X = X.reshape(B, L, num_heads, Hh // num_heads)
    X = jnp.transpose(X, (0, 2, 1, 3))
    return X.reshape(B * num_heads, L, Hh // num_heads)


def _transpose_output(X, num_heads):
    BH, L, d = X.shape
    X = X.reshape(BH // num_heads, num_heads, L, d)
    X = jnp.transpose(X, (0, 2, 1, 3))
    return X.reshape(X.shape[0], X.shape[1], num_heads * d)


def reference(q, k, v, valid_lens, params, num_heads):
    Q = q @ params["W_q"].T
    K = k @ params["W_k"].T
    V = v @ params["W_v"].T
    qs = _transpose_qkv(Q, num_heads)
    ks = _transpose_qkv(K, num_heads)
    vs = _transpose_qkv(V, num_heads)
    d = qs.shape[-1]
    Lq = qs.shape[1]
    scores = jnp.einsum("bqd,bkd->bqk", qs, ks) / math.sqrt(d)
    if valid_lens is None:
        vl = jnp.full((qs.shape[0],), Lq, dtype=jnp.int32)
    else:
        vl = jnp.repeat(valid_lens.astype(jnp.int32), num_heads, axis=0)
    q_idx = jnp.arange(Lq)
    mask = q_idx[None, :, None] < vl[:, None, None]
    masked = jnp.where(mask, scores, -1000000.0)
    w = jax.nn.softmax(masked, axis=1)          # softmax over the query axis ("dual")
    attn = jnp.einsum("bqk,bkd->bqd", w, vs)
    out = _transpose_output(attn, num_heads) @ params["W_o"].T
    return out, w


def _check(q, k, v, valid_lens, params, num_heads):
    out, attn_w = cross_multihead_attention_d(q, k, v, valid_lens, params, num_heads)
    out = jax.block_until_ready(out)
    attn_w = jax.block_until_ready(attn_w)
    ref_out, ref_w = reference(q, k, v, valid_lens, params, num_heads)
    np.testing.assert_allclose(np.asarray(out), np.asarray(ref_out),
                               rtol=1e-5, atol=1e-5)
    np.testing.assert_allclose(np.asarray(attn_w), np.asarray(ref_w),
                               rtol=1e-5, atol=1e-5)
    return out, attn_w


# ----------------------------------------------------------------------------
if __name__ == "__main__":
    Lq, Lk = 8, 8
    query_size = key_size = value_size = 16
    num_hiddens, num_heads = 32, 4

    key = jax.random.PRNGKey(0)
    k1, k2, k3, k4, kq, kk, kv, kq2, kk2, kv2 = jax.random.split(key, 10)

    # deterministic nn.Linear-shaped weights (out_features, in_features), bias=False
    params = {
        "W_q": 0.1 * jax.random.normal(k1, (num_hiddens, query_size), jnp.float32),
        "W_k": 0.1 * jax.random.normal(k2, (num_hiddens, key_size), jnp.float32),
        "W_v": 0.1 * jax.random.normal(k3, (num_hiddens, value_size), jnp.float32),
        "W_o": 0.1 * jax.random.normal(k4, (num_hiddens, num_hiddens), jnp.float32),
    }

    # --- config 1: B=2 (grid of 2 single-row steps), with and without masking ---
    B = 2
    q = jax.random.normal(kq, (B, Lq, query_size), dtype=jnp.float32)
    k = jax.random.normal(kk, (B, Lk, key_size), dtype=jnp.float32)
    v = jax.random.normal(kv, (B, Lk, value_size), dtype=jnp.float32)
    valid_lens = jnp.array([8, 5], dtype=jnp.int32)

    out, attn_w = _check(q, k, v, valid_lens, params, num_heads)
    assert out.shape == (B, Lq, num_hiddens)
    assert attn_w.shape == (B * num_heads, Lq, Lk)
    _check(q, k, v, None, params, num_heads)      # valid_lens=None path

    # --- config 2: B=8 (exercises batch_block>1: Bb=4, grid=(2,)) ---
    B2 = 8
    q2 = jax.random.normal(kq2, (B2, Lq, query_size), dtype=jnp.float32)
    k2_ = jax.random.normal(kk2, (B2, Lk, key_size), dtype=jnp.float32)
    v2_ = jax.random.normal(kv2, (B2, Lk, value_size), dtype=jnp.float32)
    valid_lens2 = jnp.array([8, 5, 3, 1, 7, 8, 2, 6], dtype=jnp.int32)

    out2, attn_w2 = _check(q2, k2_, v2_, valid_lens2, params, num_heads)
    assert out2.shape == (B2, Lq, num_hiddens)
    assert attn_w2.shape == (B2 * num_heads, Lq, Lk)

    print("KERNEL_OK")
</pallas_src>

<mosaic_0001>
module attributes {stable_mosaic.version = 11 : i64} {
  func.func @_fused_mha_kernel(%arg0: i32, %arg1: memref<2xi32, #tpu.memory_space<smem>>, %arg2: memref<1x8x16xf32, #tpu.memory_space<vmem>>, %arg3: memref<1x8x16xf32, #tpu.memory_space<vmem>>, %arg4: memref<1x8x16xf32, #tpu.memory_space<vmem>>, %arg5: memref<32x16xf32, #tpu.memory_space<vmem>>, %arg6: memref<64x32xf32, #tpu.memory_space<vmem>>, %arg7: memref<32x32xf32, #tpu.memory_space<vmem>>, %arg8: memref<1x8x32xf32, #tpu.memory_space<vmem>>, %arg9: memref<1x8x32xf32, #tpu.memory_space<vmem>>) attributes {dimension_semantics = [#tpu.dimension_semantics<parallel>], iteration_bounds = array<i64: 2>, scalar_prefetch = 1 : i64, scratch_operands = 0 : i64, tpu.core_type = #tpu.core_type<tc>, window_params = [{transform_indices = @transform_0, window_bounds = array<i64: 1, 8, 16>}, {transform_indices = @transform_1, window_bounds = array<i64: 1, 8, 16>}, {transform_indices = @transform_2, window_bounds = array<i64: 1, 8, 16>}, {pipeline_mode = #tpu.pipeline_mode<synchronous>, transform_indices = @transform_3, window_bounds = array<i64: 32, 16>}, {pipeline_mode = #tpu.pipeline_mode<synchronous>, transform_indices = @transform_4, window_bounds = array<i64: 64, 32>}, {pipeline_mode = #tpu.pipeline_mode<synchronous>, transform_indices = @transform_5, window_bounds = array<i64: 32, 32>}, {transform_indices = @transform_6, window_bounds = array<i64: 1, 8, 32>}, {transform_indices = @transform_7, window_bounds = array<i64: 1, 8, 32>}]} {
    %c0 = arith.constant 0 : index
    %c0_0 = arith.constant 0 : index
    %c0_1 = arith.constant 0 : index
    %0 = vector.load %arg2[%c0, %c0_0, %c0_1] : memref<1x8x16xf32, #tpu.memory_space<vmem>>, vector<1x8x16xf32>
    %1 = vector.shape_cast %0 : vector<1x8x16xf32> to vector<8x16xf32>
    %c0_2 = arith.constant 0 : index
    %c0_3 = arith.constant 0 : index
    %c0_4 = arith.constant 0 : index
    %2 = vector.load %arg3[%c0_2, %c0_3, %c0_4] : memref<1x8x16xf32, #tpu.memory_space<vmem>>, vector<1x8x16xf32>
    %3 = vector.shape_cast %2 : vector<1x8x16xf32> to vector<8x16xf32>
    %c0_5 = arith.constant 0 : index
    %c0_6 = arith.constant 0 : index
    %c0_7 = arith.constant 0 : index
    %4 = vector.load %arg4[%c0_5, %c0_6, %c0_7] : memref<1x8x16xf32, #tpu.memory_space<vmem>>, vector<1x8x16xf32>
    %5 = vector.shape_cast %4 : vector<1x8x16xf32> to vector<8x16xf32>
    %6 = tpu.concatenate %3, %5 in 1 : vector<8x16xf32>, vector<8x16xf32> -> vector<8x32xf32>
    %c0_8 = arith.constant 0 : index
    %c0_9 = arith.constant 0 : index
    %7 = vector.load %arg5[%c0_8, %c0_9] : memref<32x16xf32, #tpu.memory_space<vmem>>, vector<32x16xf32>
    %cst = arith.constant dense<0.000000e+00> : vector<8x32xf32>
    %8 = tpu.matmul %1, %7, %cst {dimension_numbers = #tpu.dot_dimension_numbers<[1], [1], [0], [0], [0, 0, 1, 0], [], []>} : vector<8x16xf32>, vector<32x16xf32>, vector<8x32xf32> -> vector<8x32xf32>
    %c0_10 = arith.constant 0 : index
    %c0_11 = arith.constant 0 : index
    %9 = vector.load %arg6[%c0_10, %c0_11] : memref<64x32xf32, #tpu.memory_space<vmem>>, vector<64x32xf32>
    %cst_12 = arith.constant dense<0.000000e+00> : vector<8x64xf32>
    %10 = tpu.matmul %6, %9, %cst_12 {dimension_numbers = #tpu.dot_dimension_numbers<[1], [1], [0], [0], [0, 0, 1, 0], [], []>} : vector<8x32xf32>, vector<64x32xf32>, vector<8x64xf32> -> vector<8x64xf32>
    %cst_13 = arith.constant 0.353553385 : f32
    %11 = vector.broadcast %cst_13 : f32 to vector<8x32xf32>
    %12 = arith.mulf %8, %11 : vector<8x32xf32>
    %13 = tpu.iota {dimensions = array<i32: 0>} : vector<8x1xi32>
    %c0_14 = arith.constant 0 : index
    %c0_15 = arith.constant 0 : index
    %14 = vector.load %arg7[%c0_14, %c0_15] : memref<32x32xf32, #tpu.memory_space<vmem>>, vector<32x32xf32>
    %c1_i32 = arith.constant 1 : i32
    %15 = arith.muli %arg0, %c1_i32 : i32
    %c0_i32 = arith.constant 0 : i32
    %16 = arith.addi %15, %c0_i32 : i32
    %17 = arith.index_cast %16 : i32 to index
    %18 = memref.load %arg1[%17] : memref<2xi32, #tpu.memory_space<smem>>
    %19 = vector.broadcast %18 : i32 to vector<8x1xi32>
    %20 = arith.cmpi slt, %13, %19 : vector<8x1xi32>
    %cst_16 = arith.constant 0.000000e+00 : f32
    %21 = vector.broadcast %cst_16 : f32 to vector<8x32xf32>
    %22 = vector.extract_strided_slice %12 {offsets = [0, 0], sizes = [8, 8], strides = [1, 1]} : vector<8x32xf32> to vector<8x8xf32>
    %23 = vector.extract_strided_slice %10 {offsets = [0, 0], sizes = [8, 8], strides = [1, 1]} : vector<8x64xf32> to vector<8x8xf32>
    %24 = vector.extract_strided_slice %10 {offsets = [0, 32], sizes = [8, 8], strides = [1, 1]} : vector<8x64xf32> to vector<8x8xf32>
    %cst_17 = arith.constant dense<0.000000e+00> : vector<8x8xf32>
    %25 = tpu.matmul %22, %23, %cst_17 {dimension_numbers = #tpu.dot_dimension_numbers<[1], [1], [0], [0], [0, 0, 1, 0], [], []>} : vector<8x8xf32>, vector<8x8xf32>, vector<8x8xf32> -> vector<8x8xf32>
    %cst_18 = arith.constant -1.000000e+06 : f32
    %26 = vector.shape_cast %20 : vector<8x1xi1> to vector<8x1xi1>
    %27 = vector.broadcast %26 : vector<8x1xi1> to vector<8x8xi1>
    %28 = vector.broadcast %cst_18 : f32 to vector<8x8xf32>
    %29 = arith.select %27, %25, %28 : vector<8x8xi1>, vector<8x8xf32>
    %cst_19 = arith.constant dense<0xFF800000> : vector<8xf32>
    %30 = vector.multi_reduction <maximumf>, %29, %cst_19 [0] : vector<8x8xf32> to vector<8xf32>
    %31 = vector.shape_cast %30 : vector<8xf32> to vector<1x8xf32>
    %32 = vector.broadcast %31 : vector<1x8xf32> to vector<8x8xf32>
    %33 = arith.subf %29, %32 : vector<8x8xf32>
    %34 = math.exp %33 : vector<8x8xf32>
    %cst_20 = arith.constant dense<0.000000e+00> : vector<8xf32>
    %35 = vector.multi_reduction <add>, %34, %cst_20 [0] : vector<8x8xf32> to vector<8xf32>
    %36 = vector.shape_cast %35 : vector<8xf32> to vector<1x8xf32>
    %37 = tpu.reciprocal %36 : vector<1x8xf32> -> vector<1x8xf32>
    %38 = vector.broadcast %37 : vector<1x8xf32> to vector<8x8xf32>
    %39 = arith.mulf %34, %38 : vector<8x8xf32>
    %cst_21 = arith.constant dense<0.000000e+00> : vector<8x8xf32>
    %40 = tpu.matmul %39, %24, %cst_21 {dimension_numbers = #tpu.dot_dimension_numbers<[1], [0], [0], [1], [0, 0, 1, 1], [], []>} : vector<8x8xf32>, vector<8x8xf32>, vector<8x8xf32> -> vector<8x8xf32>
    %41 = vector.extract_strided_slice %14 {offsets = [0, 0], sizes = [32, 8], strides = [1, 1]} : vector<32x32xf32> to vector<32x8xf32>
    %cst_22 = arith.constant dense<0.000000e+00> : vector<8x32xf32>
    %42 = tpu.matmul %40, %41, %cst_22 {dimension_numbers = #tpu.dot_dimension_numbers<[1], [1], [0], [0], [0, 0, 1, 0], [], []>} : vector<8x8xf32>, vector<32x8xf32>, vector<8x32xf32> -> vector<8x32xf32>
    %43 = arith.addf %21, %42 : vector<8x32xf32>
    %44 = vector.extract_strided_slice %12 {offsets = [0, 8], sizes = [8, 8], strides = [1, 1]} : vector<8x32xf32> to vector<8x8xf32>
    %45 = vector.extract_strided_slice %10 {offsets = [0, 8], sizes = [8, 8], strides = [1, 1]} : vector<8x64xf32> to vector<8x8xf32>
    %46 = vector.extract_strided_slice %10 {offsets = [0, 40], sizes = [8, 8], strides = [1, 1]} : vector<8x64xf32> to vector<8x8xf32>
    %cst_23 = arith.constant dense<0.000000e+00> : vector<8x8xf32>
    %47 = tpu.matmul %44, %45, %cst_23 {dimension_numbers = #tpu.dot_dimension_numbers<[1], [1], [0], [0], [0, 0, 1, 0], [], []>} : vector<8x8xf32>, vector<8x8xf32>, vector<8x8xf32> -> vector<8x8xf32>
    %cst_24 = arith.constant -1.000000e+06 : f32
    %48 = vector.shape_cast %20 : vector<8x1xi1> to vector<8x1xi1>
    %49 = vector.broadcast %48 : vector<8x1xi1> to vector<8x8xi1>
    %50 = vector.broadcast %cst_24 : f32 to vector<8x8xf32>
    %51 = arith.select %49, %47, %50 : vector<8x8xi1>, vector<8x8xf32>
    %cst_25 = arith.constant dense<0xFF800000> : vector<8xf32>
    %52 = vector.multi_reduction <maximumf>, %51, %cst_25 [0] : vector<8x8xf32> to vector<8xf32>
    %53 = vector.shape_cast %52 : vector<8xf32> to vector<1x8xf32>
    %54 = vector.broadcast %53 : vector<1x8xf32> to vector<8x8xf32>
    %55 = arith.subf %51, %54 : vector<8x8xf32>
    %56 = math.exp %55 : vector<8x8xf32>
    %cst_26 = arith.constant dense<0.000000e+00> : vector<8xf32>
    %57 = vector.multi_reduction <add>, %56, %cst_26 [0] : vector<8x8xf32> to vector<8xf32>
    %58 = vector.shape_cast %57 : vector<8xf32> to vector<1x8xf32>
    %59 = tpu.reciprocal %58 : vector<1x8xf32> -> vector<1x8xf32>
    %60 = vector.broadcast %59 : vector<1x8xf32> to vector<8x8xf32>
    %61 = arith.mulf %56, %60 : vector<8x8xf32>
    %cst_27 = arith.constant dense<0.000000e+00> : vector<8x8xf32>
    %62 = tpu.matmul %61, %46, %cst_27 {dimension_numbers = #tpu.dot_dimension_numbers<[1], [0], [0], [1], [0, 0, 1, 1], [], []>} : vector<8x8xf32>, vector<8x8xf32>, vector<8x8xf32> -> vector<8x8xf32>
    %63 = vector.extract_strided_slice %14 {offsets = [0, 8], sizes = [32, 8], strides = [1, 1]} : vector<32x32xf32> to vector<32x8xf32>
    %cst_28 = arith.constant dense<0.000000e+00> : vector<8x32xf32>
    %64 = tpu.matmul %62, %63, %cst_28 {dimension_numbers = #tpu.dot_dimension_numbers<[1], [1], [0], [0], [0, 0, 1, 0], [], []>} : vector<8x8xf32>, vector<32x8xf32>, vector<8x32xf32> -> vector<8x32xf32>
    %65 = arith.addf %43, %64 : vector<8x32xf32>
    %66 = vector.extract_strided_slice %12 {offsets = [0, 16], sizes = [8, 8], strides = [1, 1]} : vector<8x32xf32> to vector<8x8xf32>
    %67 = vector.extract_strided_slice %10 {offsets = [0, 16], sizes = [8, 8], strides = [1, 1]} : vector<8x64xf32> to vector<8x8xf32>
    %68 = vector.extract_strided_slice %10 {offsets = [0, 48], sizes = [8, 8], strides = [1, 1]} : vector<8x64xf32> to vector<8x8xf32>
    %cst_29 = arith.constant dense<0.000000e+00> : vector<8x8xf32>
    %69 = tpu.matmul %66, %67, %cst_29 {dimension_numbers = #tpu.dot_dimension_numbers<[1], [1], [0], [0], [0, 0, 1, 0], [], []>} : vector<8x8xf32>, vector<8x8xf32>, vector<8x8xf32> -> vector<8x8xf32>
    %cst_30 = arith.constant -1.000000e+06 : f32
    %70 = vector.shape_cast %20 : vector<8x1xi1> to vector<8x1xi1>
    %71 = vector.broadcast %70 : vector<8x1xi1> to vector<8x8xi1>
    %72 = vector.broadcast %cst_30 : f32 to vector<8x8xf32>
    %73 = arith.select %71, %69, %72 : vector<8x8xi1>, vector<8x8xf32>
    %cst_31 = arith.constant dense<0xFF800000> : vector<8xf32>
    %74 = vector.multi_reduction <maximumf>, %73, %cst_31 [0] : vector<8x8xf32> to vector<8xf32>
    %75 = vector.shape_cast %74 : vector<8xf32> to vector<1x8xf32>
    %76 = vector.broadcast %75 : vector<1x8xf32> to vector<8x8xf32>
    %77 = arith.subf %73, %76 : vector<8x8xf32>
    %78 = math.exp %77 : vector<8x8xf32>
    %cst_32 = arith.constant dense<0.000000e+00> : vector<8xf32>
    %79 = vector.multi_reduction <add>, %78, %cst_32 [0] : vector<8x8xf32> to vector<8xf32>
    %80 = vector.shape_cast %79 : vector<8xf32> to vector<1x8xf32>
    %81 = tpu.reciprocal %80 : vector<1x8xf32> -> vector<1x8xf32>
    %82 = vector.broadcast %81 : vector<1x8xf32> to vector<8x8xf32>
    %83 = arith.mulf %78, %82 : vector<8x8xf32>
    %cst_33 = arith.constant dense<0.000000e+00> : vector<8x8xf32>
    %84 = tpu.matmul %83, %68, %cst_33 {dimension_numbers = #tpu.dot_dimension_numbers<[1], [0], [0], [1], [0, 0, 1, 1], [], []>} : vector<8x8xf32>, vector<8x8xf32>, vector<8x8xf32> -> vector<8x8xf32>
    %85 = vector.extract_strided_slice %14 {offsets = [0, 16], sizes = [32, 8], strides = [1, 1]} : vector<32x32xf32> to vector<32x8xf32>
    %cst_34 = arith.constant dense<0.000000e+00> : vector<8x32xf32>
    %86 = tpu.matmul %84, %85, %cst_34 {dimension_numbers = #tpu.dot_dimension_numbers<[1], [1], [0], [0], [0, 0, 1, 0], [], []>} : vector<8x8xf32>, vector<32x8xf32>, vector<8x32xf32> -> vector<8x32xf32>
    %87 = arith.addf %65, %86 : vector<8x32xf32>
    %88 = vector.extract_strided_slice %12 {offsets = [0, 24], sizes = [8, 8], strides = [1, 1]} : vector<8x32xf32> to vector<8x8xf32>
    %89 = vector.extract_strided_slice %10 {offsets = [0, 24], sizes = [8, 8], strides = [1, 1]} : vector<8x64xf32> to vector<8x8xf32>
    %90 = vector.extract_strided_slice %10 {offsets = [0, 56], sizes = [8, 8], strides = [1, 1]} : vector<8x64xf32> to vector<8x8xf32>
    %cst_35 = arith.constant dense<0.000000e+00> : vector<8x8xf32>
    %91 = tpu.matmul %88, %89, %cst_35 {dimension_numbers = #tpu.dot_dimension_numbers<[1], [1], [0], [0], [0, 0, 1, 0], [], []>} : vector<8x8xf32>, vector<8x8xf32>, vector<8x8xf32> -> vector<8x8xf32>
    %cst_36 = arith.constant -1.000000e+06 : f32
    %92 = vector.shape_cast %20 : vector<8x1xi1> to vector<8x1xi1>
    %93 = vector.broadcast %92 : vector<8x1xi1> to vector<8x8xi1>
    %94 = vector.broadcast %cst_36 : f32 to vector<8x8xf32>
    %95 = arith.select %93, %91, %94 : vector<8x8xi1>, vector<8x8xf32>
    %cst_37 = arith.constant dense<0xFF800000> : vector<8xf32>
    %96 = vector.multi_reduction <maximumf>, %95, %cst_37 [0] : vector<8x8xf32> to vector<8xf32>
    %97 = vector.shape_cast %96 : vector<8xf32> to vector<1x8xf32>
    %98 = vector.broadcast %97 : vector<1x8xf32> to vector<8x8xf32>
    %99 = arith.subf %95, %98 : vector<8x8xf32>
    %100 = math.exp %99 : vector<8x8xf32>
    %cst_38 = arith.constant dense<0.000000e+00> : vector<8xf32>
    %101 = vector.multi_reduction <add>, %100, %cst_38 [0] : vector<8x8xf32> to vector<8xf32>
    %102 = vector.shape_cast %101 : vector<8xf32> to vector<1x8xf32>
    %103 = tpu.reciprocal %102 : vector<1x8xf32> -> vector<1x8xf32>
    %104 = vector.broadcast %103 : vector<1x8xf32> to vector<8x8xf32>
    %105 = arith.mulf %100, %104 : vector<8x8xf32>
    %cst_39 = arith.constant dense<0.000000e+00> : vector<8x8xf32>
    %106 = tpu.matmul %105, %90, %cst_39 {dimension_numbers = #tpu.dot_dimension_numbers<[1], [0], [0], [1], [0, 0, 1, 1], [], []>} : vector<8x8xf32>, vector<8x8xf32>, vector<8x8xf32> -> vector<8x8xf32>
    %107 = vector.extract_strided_slice %14 {offsets = [0, 24], sizes = [32, 8], strides = [1, 1]} : vector<32x32xf32> to vector<32x8xf32>
    %cst_40 = arith.constant dense<0.000000e+00> : vector<8x32xf32>
    %108 = tpu.matmul %106, %107, %cst_40 {dimension_numbers = #tpu.dot_dimension_numbers<[1], [1], [0], [0], [0, 0, 1, 0], [], []>} : vector<8x8xf32>, vector<32x8xf32>, vector<8x32xf32> -> vector<8x32xf32>
    %109 = arith.addf %87, %108 : vector<8x32xf32>
    %110 = tpu.concatenate %39, %61, %83, %105 in 1 : vector<8x8xf32>, vector<8x8xf32>, vector<8x8xf32>, vector<8x8xf32> -> vector<8x32xf32>
    %c0_41 = arith.constant 0 : index
    %c0_42 = arith.constant 0 : index
    %c0_43 = arith.constant 0 : index
    %111 = vector.load %arg9[%c0_41, %c0_42, %c0_43] : memref<1x8x32xf32, #tpu.memory_space<vmem>>, vector<1x8x32xf32>
    %112 = vector.shape_cast %111 : vector<1x8x32xf32> to vector<8x32xf32>
    %113 = vector.shape_cast %110 : vector<8x32xf32> to vector<1x8x32xf32>
    tpu.vector_store %arg9[%c0_41, %c0_42, %c0_43], %113 {strides = array<i32>} : memref<1x8x32xf32, #tpu.memory_space<vmem>>, vector<1x8x32xf32>,
    %c0_44 = arith.constant 0 : index
    %c0_45 = arith.constant 0 : index
    %c0_46 = arith.constant 0 : index
    %114 = vector.load %arg8[%c0_44, %c0_45, %c0_46] : memref<1x8x32xf32, #tpu.memory_space<vmem>>, vector<1x8x32xf32>
    %115 = vector.shape_cast %114 : vector<1x8x32xf32> to vector<8x32xf32>
    %116 = vector.shape_cast %109 : vector<8x32xf32> to vector<1x8x32xf32>
    tpu.vector_store %arg8[%c0_44, %c0_45, %c0_46], %116 {strides = array<i32>} : memref<1x8x32xf32, #tpu.memory_space<vmem>>, vector<1x8x32xf32>,
    return
  }
  func.func @transform_0(%arg0: i32, %arg1: memref<2xi32, #tpu.memory_space<smem>>) -> (i32, i32, i32) {
    %c0_i32 = arith.constant 0 : i32
    %c0_i32_0 = arith.constant 0 : i32
    %c0_i32_1 = arith.constant 0 : i32
    return %arg0, %c0_i32, %c0_i32_0 : i32, i32, i32
  }
  func.func @transform_1(%arg0: i32, %arg1: memref<2xi32, #tpu.memory_space<smem>>) -> (i32, i32, i32) {
    %c0_i32 = arith.constant 0 : i32
    %c0_i32_0 = arith.constant 0 : i32
    %c0_i32_1 = arith.constant 0 : i32
    return %arg0, %c0_i32, %c0_i32_0 : i32, i32, i32
  }
  func.func @transform_2(%arg0: i32, %arg1: memref<2xi32, #tpu.memory_space<smem>>) -> (i32, i32, i32) {
    %c0_i32 = arith.constant 0 : i32
    %c0_i32_0 = arith.constant 0 : i32
    %c0_i32_1 = arith.constant 0 : i32
    return %arg0, %c0_i32, %c0_i32_0 : i32, i32, i32
  }
  func.func @transform_3(%arg0: i32, %arg1: memref<2xi32, #tpu.memory_space<smem>>) -> (i32, i32) {
    %c0_i32 = arith.constant 0 : i32
    %c0_i32_0 = arith.constant 0 : i32
    %c0_i32_1 = arith.constant 0 : i32
    return %c0_i32, %c0_i32_0 : i32, i32
  }
  func.func @transform_4(%arg0: i32, %arg1: memref<2xi32, #tpu.memory_space<smem>>) -> (i32, i32) {
    %c0_i32 = arith.constant 0 : i32
    %c0_i32_0 = arith.constant 0 : i32
    %c0_i32_1 = arith.constant 0 : i32
    return %c0_i32, %c0_i32_0 : i32, i32
  }
  func.func @transform_5(%arg0: i32, %arg1: memref<2xi32, #tpu.memory_space<smem>>) -> (i32, i32) {
    %c0_i32 = arith.constant 0 : i32
    %c0_i32_0 = arith.constant 0 : i32
    %c0_i32_1 = arith.constant 0 : i32
    return %c0_i32, %c0_i32_0 : i32, i32
  }
  func.func @transform_6(%arg0: i32, %arg1: memref<2xi32, #tpu.memory_space<smem>>) -> (i32, i32, i32) {
    %c0_i32 = arith.constant 0 : i32
    %c0_i32_0 = arith.constant 0 : i32
    %c0_i32_1 = arith.constant 0 : i32
    return %arg0, %c0_i32, %c0_i32_0 : i32, i32, i32
  }
  func.func @transform_7(%arg0: i32, %arg1: memref<2xi32, #tpu.memory_space<smem>>) -> (i32, i32, i32) {
    %c0_i32 = arith.constant 0 : i32
    %c0_i32_0 = arith.constant 0 : i32
    %c0_i32_1 = arith.constant 0 : i32
    return %arg0, %c0_i32, %c0_i32_0 : i32, i32, i32
  }
}

</mosaic_0001>

<llo_original>
// kernel: tpu_custom_call.1
$region0: #{tpu_custom_call.1}
  #allocation0 [shape = 'u32[]', space=smem, size = 0x4, offset = 0x4, fixed_abs, tag = 'smem constant byte address 0x4 - core index']
  #allocation1 [shape = 'u32[144,128]{1,0:T(1,128)}', space=vmem, size = 0x12000, scoped, tag = 'internal scratch']
  #allocation2 [shape = 's32[1]{0}', space=sflag, size = 0x4, scoped, tag = 'scoped memory for tpu_custom_call.1']
  #allocation3 [shape = 'u8[512]{0}', space=smem, size = 0x200, scoped, tag = 'prefetched SMEM operand 0']
  %s0 = inlined_call_operand.vmem [shape: s32[2], index: 0, kind: input, shape index: {}]
  %s1 = inlined_call_operand.vmem [shape: f32[2,8,16], index: 1, kind: input, shape index: {}]
  %s2 = inlined_call_operand.vmem [shape: f32[2,8,16], index: 2, kind: input, shape index: {}]
  %s3 = inlined_call_operand.vmem [shape: f32[2,8,16], index: 3, kind: input, shape index: {}]
  %s4 = inlined_call_operand.vmem [shape: f32[32,16], index: 4, kind: input, shape index: {}]
  %s5 = inlined_call_operand.vmem [shape: f32[64,32], index: 5, kind: input, shape index: {}]
  %s6 = inlined_call_operand.vmem [shape: f32[32,32], index: 6, kind: input, shape index: {}]
  %s7 = inlined_call_operand.hbm [shape: f32[2,8,32], index: 7, kind: output, shape index: {0}]
  %s8 = inlined_call_operand.hbm [shape: f32[2,8,32], index: 8, kind: output, shape index: {1}]
  %9 = xla_tuple %s7, %s8
  %s10 = sld [smem:[#allocation0]]
  $region65: #{tpu_custom_call.1} parent=0
    _
  %s12 = ssub.s32 1, %s10
  %s13 = scalar_select 0, %s12, %s10
  %s14 = sshll.u32 %s0, 4
  %s15 = int_to_ptr.vmem [resolvable:$true] %s14
  %17 = dma.vmem_to_smem %s15, 16, [#allocation3], [#allocation2]
  %18 = dma.done [#allocation2], 16
  %19 = sfence
  $region1: #{tpu_custom_call.1} parent=0
    #allocation4 [shape = 'u8[8192]{0}', space=vmem, size = 0x2000, scoped, tag = 'output window, operand 0']
    #allocation5 [shape = 's32[2]{0}', space=sflag, size = 0x8, scoped, tag = 'scoped memory for tpu_custom_call.1']
    #allocation6 [shape = 'u8[8192]{0}', space=vmem, size = 0x2000, scoped, tag = 'output window, operand 1']
    #allocation7 [shape = 's32[2]{0}', space=sflag, size = 0x8, scoped, tag = 'scoped memory for tpu_custom_call.1']
    %20 = vsyncpa [#allocation5], 0
    %s21 = scalar_lea.sflag [#allocation5], 1
    %22 = vsyncpa %s21, 0
    %23 = vsyncpa [#allocation7], 0
    %s24 = scalar_lea.sflag [#allocation7], 1
    %25 = vsyncpa %s24, 0
    loop: start=0, step=1, limit=4
    $region2: #{tpu_custom_call.1} parent=1 // loop_pre_header
      _
    $region3: #{tpu_custom_call.1} parent=1 // loop_header
      %s27 = sphi 0, %s31
      %p28 = scmp.ge.s32.totalorder %s27, 4
      %s37 = sphi 0, %s39
      %s40 = sphi 0, %s37
      %s41 = sphi 0, %s40
      %s57 = sphi 0, %s41
      %s63 = sphi 0, %s65
      %s66 = sphi 0, %s63
      %s67 = sphi 0, %s66
      %s83 = sphi 0, %s67
      %s89 = sphi 0, %s91
      %s92 = sphi 0, %s89
      %s93 = sphi 0, %s92
      %s109 = sphi 0, %s93
      %s113 = sphi 0, %s113
      %s115 = sphi 0, %s113
      %s116 = sphi 0, %s115
      %s130 = sphi 0, %s116
      %s134 = sphi 0, %s134
      %s136 = sphi 0, %s134
      %s137 = sphi 0, %s136
      %s151 = sphi 0, %s137
      %s155 = sphi 0, %s155
      %s157 = sphi 0, %s155
      %s158 = sphi 0, %s157
      %s172 = sphi 0, %s158
      %s178 = sphi 0, %s180
      %s181 = sphi 0, %s178
      %s182 = sphi 0, %s181
      %s198 = sphi 0, %s182
      %s204 = sphi 0, %s206
      %s207 = sphi 0, %s204
      %s208 = sphi 0, %s207
      %s224 = sphi 0, %s208
    $region4: #{tpu_custom_call.1} parent=1 // loop_header_branch
      %30 = sbr.rel (%p28) target = $region8
    $region5: #{tpu_custom_call.1} parent=1 // loop_body
      %s32 = ssub.s32 %s27, 1
      %s33 = ssub.s32 %s27, 2
      %s34 = sadd.s32 %s27, 1
      %s35 = ssub.s32 %s27, %s34
      %p36 = scmp.eq.s32.totalorder %s35, 0
      %s38 = sadd.s32 %s37, 1
      %s39 = scalar_select %p36, %s37, %s38
      %p42 = pneg %p36
      %p43 = scmp.eq.s32.totalorder %s27, 1
      %p44 = por %p42, %p43
      %p45 = scmp.ne.s32.totalorder %s37, %s40
      %p46 = scmp.eq.s32.totalorder %s27, 0
      %p47 = por %p45, %p46
      %p48 = scmp.ne.s32.totalorder %s37, %s40
      %p49 = scmp.eq.s32.totalorder %s32, 1
      %p50 = por %p48, %p49
      %p51 = scmp.ne.s32.totalorder %s40, %s41
      %p52 = scmp.eq.s32.totalorder %s32, 0
      %p53 = por %p51, %p52
      %p54 = scmp.ne.s32.totalorder %s40, %s41
      %p55 = scmp.eq.s32.totalorder %s33, 1
      %p56 = por %p54, %p55
      %p58 = scmp.ne.s32.totalorder %s41, %s57
      %p59 = scmp.eq.s32.totalorder %s33, 0
      %p60 = por %p58, %p59
      %s61 = ssub.s32 %s27, %s34
      %p62 = scmp.eq.s32.totalorder %s61, 0
      %s64 = sadd.s32 %s63, 1
      %s65 = scalar_select %p62, %s63, %s64
      %p68 = pneg %p62
      %p69 = scmp.eq.s32.totalorder %s27, 1
      %p70 = por %p68, %p69
      %p71 = scmp.ne.s32.totalorder %s63, %s66
      %p72 = scmp.eq.s32.totalorder %s27, 0
      %p73 = por %p71, %p72
      %p74 = scmp.ne.s32.totalorder %s63, %s66
      %p75 = scmp.eq.s32.totalorder %s32, 1
      %p76 = por %p74, %p75
      %p77 = scmp.ne.s32.totalorder %s66, %s67
      %p78 = scmp.eq.s32.totalorder %s32, 0
      %p79 = por %p77, %p78
      %p80 = scmp.ne.s32.totalorder %s66, %s67
      %p81 = scmp.eq.s32.totalorder %s33, 1
      %p82 = por %p80, %p81
      %p84 = scmp.ne.s32.totalorder %s67, %s83
      %p85 = scmp.eq.s32.totalorder %s33, 0
      %p86 = por %p84, %p85
      %s87 = ssub.s32 %s27, %s34
      %p88 = scmp.eq.s32.totalorder %s87, 0
      %s90 = sadd.s32 %s89, 1
      %s91 = scalar_select %p88, %s89, %s90
      %p94 = pneg %p88
      %p95 = scmp.eq.s32.totalorder %s27, 1
      %p96 = por %p94, %p95
      %p97 = scmp.ne.s32.totalorder %s89, %s92
      %p98 = scmp.eq.s32.totalorder %s27, 0
      %p99 = por %p97, %p98
      %p100 = scmp.ne.s32.totalorder %s89, %s92
      %p101 = scmp.eq.s32.totalorder %s32, 1
      %p102 = por %p100, %p101
      %p103 = scmp.ne.s32.totalorder %s92, %s93
      %p104 = scmp.eq.s32.totalorder %s32, 0
      %p105 = por %p103, %p104
      %p106 = scmp.ne.s32.totalorder %s92, %s93
      %p107 = scmp.eq.s32.totalorder %s33, 1
      %p108 = por %p106, %p107
      %p110 = scmp.ne.s32.totalorder %s93, %s109
      %p111 = scmp.eq.s32.totalorder %s33, 0
      %p112 = por %p110, %p111
      %s114 = sadd.s32 %s113, 1
      %p117 = scmp.eq.s32.totalorder %s27, 1
      %p118 = scmp.ne.s32.totalorder %s113, %s115
      %p119 = scmp.eq.s32.totalorder %s27, 0
      %p120 = por %p118, %p119
      %p121 = scmp.ne.s32.totalorder %s113, %s115
      %p122 = scmp.eq.s32.totalorder %s32, 1
      %p123 = por %p121, %p122
      %p124 = scmp.ne.s32.totalorder %s115, %s116
      %p125 = scmp.eq.s32.totalorder %s32, 0
      %p126 = por %p124, %p125
      %p127 = scmp.ne.s32.totalorder %s115, %s116
      %p128 = scmp.eq.s32.totalorder %s33, 1
      %p129 = por %p127, %p128
      %p131 = scmp.ne.s32.totalorder %s116, %s130
      %p132 = scmp.eq.s32.totalorder %s33, 0
      %p133 = por %p131, %p132
      %s135 = sadd.s32 %s134, 1
      %p138 = scmp.eq.s32.totalorder %s27, 1
      %p139 = scmp.ne.s32.totalorder %s134, %s136
      %p140 = scmp.eq.s32.totalorder %s27, 0
      %p141 = por %p139, %p140
      %p142 = scmp.ne.s32.totalorder %s134, %s136
      %p143 = scmp.eq.s32.totalorder %s32, 1
      %p144 = por %p142, %p143
      %p145 = scmp.ne.s32.totalorder %s136, %s137
      %p146 = scmp.eq.s32.totalorder %s32, 0
      %p147 = por %p145, %p146
      %p148 = scmp.ne.s32.totalorder %s136, %s137
      %p149 = scmp.eq.s32.totalorder %s33, 1
      %p150 = por %p148, %p149
      %p152 = scmp.ne.s32.totalorder %s137, %s151
      %p153 = scmp.eq.s32.totalorder %s33, 0
      %p154 = por %p152, %p153
      %s156 = sadd.s32 %s155, 1
      %p159 = scmp.eq.s32.totalorder %s27, 1
      %p160 = scmp.ne.s32.totalorder %s155, %s157
      %p161 = scmp.eq.s32.totalorder %s27, 0
      %p162 = por %p160, %p161
      %p163 = scmp.ne.s32.totalorder %s155, %s157
      %p164 = scmp.eq.s32.totalorder %s32, 1
      %p165 = por %p163, %p164
      %p166 = scmp.ne.s32.totalorder %s157, %s158
      %p167 = scmp.eq.s32.totalorder %s32, 0
      %p168 = por %p166, %p167
      %p169 = scmp.ne.s32.totalorder %s157, %s158
      %p170 = scmp.eq.s32.totalorder %s33, 1
      %p171 = por %p169, %p170
      %p173 = scmp.ne.s32.totalorder %s158, %s172
      %p174 = scmp.eq.s32.totalorder %s33, 0
      %p175 = por %p173, %p174
      %s176 = ssub.s32 %s27, %s34
      %p177 = scmp.eq.s32.totalorder %s176, 0
      %s179 = sadd.s32 %s178, 1
      %s180 = scalar_select %p177, %s178, %s179
      %p183 = pneg %p177
      %p184 = scmp.eq.s32.totalorder %s27, 1
      %p185 = por %p183, %p184
      %p186 = scmp.ne.s32.totalorder %s178, %s181
      %p187 = scmp.eq.s32.totalorder %s27, 0
      %p188 = por %p186, %p187
      %p189 = scmp.ne.s32.totalorder %s178, %s181
      %p190 = scmp.eq.s32.totalorder %s32, 1
      %p191 = por %p189, %p190
      %p192 = scmp.ne.s32.totalorder %s181, %s182
      %p193 = scmp.eq.s32.totalorder %s32, 0
      %p194 = por %p192, %p193
      %p195 = scmp.ne.s32.totalorder %s181, %s182
      %p196 = scmp.eq.s32.totalorder %s33, 1
      %p197 = por %p195, %p196
      %p199 = scmp.ne.s32.totalorder %s182, %s198
      %p200 = scmp.eq.s32.totalorder %s33, 0
      %p201 = por %p199, %p200
      %s202 = ssub.s32 %s27, %s34
      %p203 = scmp.eq.s32.totalorder %s202, 0
      %s205 = sadd.s32 %s204, 1
      %s206 = scalar_select %p203, %s204, %s205
      %p209 = pneg %p203
      %p210 = scmp.eq.s32.totalorder %s27, 1
      %p211 = por %p209, %p210
      %p212 = scmp.ne.s32.totalorder %s204, %s207
      %p213 = scmp.eq.s32.totalorder %s27, 0
      %p214 = por %p212, %p213
      %p215 = scmp.ne.s32.totalorder %s204, %s207
      %p216 = scmp.eq.s32.totalorder %s32, 1
      %p217 = por %p215, %p216
      %p218 = scmp.ne.s32.totalorder %s207, %s208
      %p219 = scmp.eq.s32.totalorder %s32, 0
      %p220 = por %p218, %p219
      %p221 = scmp.ne.s32.totalorder %s207, %s208
      %p222 = scmp.eq.s32.totalorder %s33, 1
      %p223 = por %p221, %p222
      %p225 = scmp.ne.s32.totalorder %s208, %s224
      %p226 = scmp.eq.s32.totalorder %s33, 0
      %p227 = por %p225, %p226
      %p228 = scmp.le.s32.totalorder 1, %s27
      %p229 = scmp.lt.s32.totalorder %s27, 3
      %p230 = pnand %p228, %p229
      %p231 = pneg %p230
      // Predicated region
      $region9: #{tpu_custom_call.1} parent=5 // pred_check
        _
      $region10: #{tpu_custom_call.1} parent=5 // pred_check_branch
        %233 = sbr.rel (%p230) target = $region12
      $region11: #{tpu_custom_call.1} parent=5 // pred_region
        %s234 = ssub.s32 %s27, 1
        // Predicated region
        $region13: #{tpu_custom_call.1} parent=11 // pred_check
          %p235 = pneg %p126
        $region14: #{tpu_custom_call.1} parent=11 // pred_check_branch
          %237 = sbr.rel (%p235) target = $region16
        $region15: #{tpu_custom_call.1} parent=11 // pred_region
          _
        $region16: #{tpu_custom_call.1} parent=11 // pred_fallthru
          _
        // Predicated region
        $region17: #{tpu_custom_call.1} parent=11 // pred_check
          %p238 = pneg %p147
        $region18: #{tpu_custom_call.1} parent=11 // pred_check_branch
          %240 = sbr.rel (%p238) target = $region20
        $region19: #{tpu_custom_call.1} parent=11 // pred_region
          _
        $region20: #{tpu_custom_call.1} parent=11 // pred_fallthru
          _
        // Predicated region
        $region21: #{tpu_custom_call.1} parent=11 // pred_check
          %p241 = pneg %p168
        $region22: #{tpu_custom_call.1} parent=11 // pred_check_branch
          %243 = sbr.rel (%p241) target = $region24
        $region23: #{tpu_custom_call.1} parent=11 // pred_region
          _
        $region24: #{tpu_custom_call.1} parent=11 // pred_fallthru
          _
      $region12: #{tpu_custom_call.1} parent=5 // pred_fallthru
        _
      %p244 = scmp.lt.s32.totalorder %s27, 2
      // Predicated region
      $region25: #{tpu_custom_call.1} parent=5 // pred_check
        %p245 = pneg %p244
      $region26: #{tpu_custom_call.1} parent=5 // pred_check_branch
        %247 = sbr.rel (%p245) target = $region28
      $region27: #{tpu_custom_call.1} parent=5 // pred_region
        // Predicated region
        $region29: #{tpu_custom_call.1} parent=27 // pred_check
          %p248 = pneg %p47
        $region30: #{tpu_custom_call.1} parent=27 // pred_check_branch
          %250 = sbr.rel (%p248) target = $region32
        $region31: #{tpu_custom_call.1} parent=27 // pred_region
          %p251 = scmp.lt.s32.totalorder %s27, 1
          %s252 = scalar_select %p251, %s27, 1
          %s253 = smul.addr %s252, 8
          %s254 = scalar_lea.vmem %s1, %s253
        $region32: #{tpu_custom_call.1} parent=27 // pred_fallthru
          _
        // Predicated region
        $region33: #{tpu_custom_call.1} parent=27 // pred_check
          %p255 = pneg %p73
        $region34: #{tpu_custom_call.1} parent=27 // pred_check_branch
          %257 = sbr.rel (%p255) target = $region36
        $region35: #{tpu_custom_call.1} parent=27 // pred_region
          %p258 = scmp.lt.s32.totalorder %s27, 1
          %s259 = scalar_select %p258, %s27, 1
          %s260 = smul.addr %s259, 8
          %s261 = scalar_lea.vmem %s2, %s260
        $region36: #{tpu_custom_call.1} parent=27 // pred_fallthru
          _
        // Predicated region
        $region37: #{tpu_custom_call.1} parent=27 // pred_check
          %p262 = pneg %p99
        $region38: #{tpu_custom_call.1} parent=27 // pred_check_branch
          %264 = sbr.rel (%p262) target = $region40
        $region39: #{tpu_custom_call.1} parent=27 // pred_region
          %p265 = scmp.lt.s32.totalorder %s27, 1
          %s266 = scalar_select %p265, %s27, 1
          %s267 = smul.addr %s266, 8
          %s268 = scalar_lea.vmem %s3, %s267
        $region40: #{tpu_custom_call.1} parent=27 // pred_fallthru
          _
      $region28: #{tpu_custom_call.1} parent=5 // pred_fallthru
        _
      %p269 = scmp.le.s32.totalorder 1, %s27
      %p270 = scmp.lt.s32.totalorder %s27, 3
      %p271 = pnand %p269, %p270
      %p272 = pneg %p271
      // Predicated region
      $region41: #{tpu_custom_call.1} parent=5 // pred_check
        _
      $region42: #{tpu_custom_call.1} parent=5 // pred_check_branch
        %274 = sbr.rel (%p271) target = $region44
      $region43: #{tpu_custom_call.1} parent=5 // pred_region
        %s275 = ssub.s32 %s27, 1
        %p276 = scmp.lt.s32.totalorder %s32, 1
        %s277 = scalar_select %p276, %s32, 1
        %s278 = smul.addr %s277, 8
        %s279 = scalar_lea.vmem %s1, %s278
        %p280 = pneg %p53
        %p281 = pneg %p50
        %p282 = scmp.lt.s32.totalorder %s32, 1
        %s283 = scalar_select %p282, %s32, 1
        %s284 = smul.addr %s283, 8
        %s285 = scalar_lea.vmem %s2, %s284
        %p286 = pneg %p79
        %p287 = pneg %p76
        %p288 = scmp.lt.s32.totalorder %s32, 1
        %s289 = scalar_select %p288, %s32, 1
        %s290 = smul.addr %s289, 8
        %s291 = scalar_lea.vmem %s3, %s290
        %p292 = pneg %p105
        %p293 = pneg %p102
        %p294 = pneg %p126
        %p295 = pneg %p123
        %p296 = pneg %p147
        %p297 = pneg %p144
        %p298 = pneg %p168
        %p299 = pneg %p165
        %p300 = pneg %p194
        %p301 = pneg %p191
        %s302 = sand.u32 %s181, 1
        %s303 = scalar_lea.sflag [#allocation5], %s302
        %s304 = sand.u32 %s181, 1
        %s305 = smul.addr %s304, 8
        %s306 = scalar_lea.vmem [#allocation4], %s305
        %p307 = pneg %p220
        %p308 = pneg %p217
        %s309 = sand.u32 %s207, 1
        %s310 = scalar_lea.sflag [#allocation7], %s309
        %s311 = sand.u32 %s207, 1
        %s312 = smul.addr %s311, 8
        %s313 = scalar_lea.vmem [#allocation6], %s312
        %p314 = scmp.lt.s32.totalorder %s32, 1
        %s315 = scalar_select %p314, %s32, 1
        %s316 = smul.addr %s315, 8
        %s317 = scalar_lea.vmem %s1, %s316
        %p318 = scmp.lt.s32.totalorder %s32, 1
        %s319 = scalar_select %p318, %s32, 1
        %s320 = smul.addr %s319, 8
        %s321 = scalar_lea.vmem %s2, %s320
        %p322 = scmp.lt.s32.totalorder %s32, 1
        %s323 = scalar_select %p322, %s32, 1
        %s324 = smul.addr %s323, 8
        %s325 = scalar_lea.vmem %s3, %s324
        %v326 = vld [vmem:[%s317] sm:$0xff]
        %v327 = vld [vmem:[%s321] sm:$0xff]
        %v328 = vld [vmem:[%s325] sm:$0xff]
        %330 = vrot.lane.b32.xlu0 %v328, 16
        %v331 = vpop.permute.xlu0 %330
        %vm333 = vcmask 130048
        %v334 = vsel %vm333, %v327, %v331
        %v335 = vld [vmem:[%s4] sm:$0xff]
        %v336 = vld [vmem:[%s4 + $0x8] sm:$0xff]
        %v337 = vld [vmem:[%s4 + $0x10] sm:$0xff]
        %v338 = vld [vmem:[%s4 + $0x18] sm:$0xff]
        %v340 = vsel %vm333, %v326, 0
        %v343 = vsel %vm333, %v335, 0
        %v346 = vsel %vm333, %v336, 0
        %v349 = vsel %vm333, %v337, 0
        %v352 = vsel %vm333, %v338, 0
        %354 = vmatprep.subr.mxu0 0.0
        %355 = vmatpush1.xpose.msra.mxu0 0.0
        %356 = vmatprep.subr.mxu0 0.0
        %357 = vmatpush1.xpose.msra.mxu0 0.0
        %358 = vmatprep.subr.mxu0 0.0
        %359 = vmatpush1.xpose.msra.mxu0 0.0
        %360 = vmatprep.subr.mxu0 0.0
        %361 = vmatpush1.xpose.msra.mxu0 0.0
        %362 = vmatprep.subr.mxu0 0.0
        %363 = vmatpush1.xpose.msra.mxu0 0.0
        %364 = vmatprep.subr.mxu0 0.0
        %365 = vmatpush1.xpose.msra.mxu0 0.0
        %366 = vmatprep.subr.mxu0 0.0
        %367 = vmatpush1.xpose.msra.mxu0 0.0
        %368 = vmatprep.subr.mxu0 0.0
        %369 = vmatpush1.xpose.msra.mxu0 0.0
        %370 = vmatprep.subr.mxu0 0.0
        %371 = vmatpush1.xpose.msra.mxu0 0.0
        %372 = vmatprep.subr.mxu0 0.0
        %373 = vmatpush1.xpose.msra.mxu0 0.0
        %374 = vmatprep.subr.mxu0 0.0
        %375 = vmatpush1.xpose.msra.mxu0 0.0
        %376 = vmatprep.subr.mxu0 0.0
        %377 = vmatpush1.xpose.msra.mxu0 0.0
        %378 = vmatprep.subr.mxu0 0.0
        %379 = vmatpush1.xpose.msra.mxu0 %v352
        %380 = vmatprep.subr.mxu0 0.0
        %381 = vmatpush1.xpose.msra.mxu0 %v349
        %382 = vmatprep.subr.mxu0 0.0
        %383 = vmatpush1.xpose.msra.mxu0 %v346
        %384 = vmatprep.subr.mxu0 0.0
        %385 = vmatpush1.xpose.msra.mxu0 %v343
        %386 = vmatprep.subr.mxu0 0.0
        %387 = vmatpush2.xpose.msra.mxu0 0.0
        %388 = vmatprep.subr.mxu0 0.0
        %389 = vmatpush2.xpose.msra.mxu0 0.0
        %390 = vmatprep.subr.mxu0 0.0
        %391 = vmatpush2.xpose.msra.mxu0 0.0
        %392 = vmatprep.subr.mxu0 0.0
        %393 = vmatpush2.xpose.msra.mxu0 0.0
        %394 = vmatprep.subr.mxu0 0.0
        %395 = vmatpush2.xpose.msra.mxu0 0.0
        %396 = vmatprep.subr.mxu0 0.0
        %397 = vmatpush2.xpose.msra.mxu0 0.0
        %398 = vmatprep.subr.mxu0 0.0
        %399 = vmatpush2.xpose.msra.mxu0 0.0
        %400 = vmatprep.subr.mxu0 0.0
        %401 = vmatpush2.xpose.msra.mxu0 0.0
        %402 = vmatprep.subr.mxu0 0.0
        %403 = vmatpush2.xpose.msra.mxu0 0.0
        %404 = vmatprep.subr.mxu0 0.0
        %405 = vmatpush2.xpose.msra.mxu0 0.0
        %406 = vmatprep.subr.mxu0 0.0
        %407 = vmatpush2.xpose.msra.mxu0 0.0
        %408 = vmatprep.subr.mxu0 0.0
        %409 = vmatpush2.xpose.msra.mxu0 0.0
        %410 = vmatprep.subr.mxu0 0.0
        %411 = vmatpush2.xpose.msra.mxu0 0.0
        %412 = vmatprep.subr.mxu0 0.0
        %413 = vmatpush2.xpose.msra.mxu0 0.0
        %414 = vmatprep.subr.mxu0 0.0
        %415 = vmatpush2.xpose.msra.mxu0 0.0
        %416 = vmatprep.subr.mxu0 0.0
        %417 = vmatpush2.xpose.msra.mxu0 0.0
        %418 = vmatprep.mubr.f32.mxu0 0.0
        %419 = vmatmul.mubr.f32.gmra.mxu0 %v340
        %v420 = vpop.f32.mrf.mxu0
        %v421 = vadd.f32 0.0, %v420
        %v422 = vpop.f32.mrf.mxu0
        %423 = vdwg.mxu0
        %v424 = vld [vmem:[%s5] sm:$0xff]
        %v425 = vld [vmem:[%s5 + $0x8] sm:$0xff]
        %v426 = vld [vmem:[%s5 + $0x10] sm:$0xff]
        %v427 = vld [vmem:[%s5 + $0x18] sm:$0xff]
        %v428 = vld [vmem:[%s5 + $0x20] sm:$0xff]
        %v429 = vld [vmem:[%s5 + $0x28] sm:$0xff]
        %v430 = vld [vmem:[%s5 + $0x30] sm:$0xff]
        %v431 = vld [vmem:[%s5 + $0x38] sm:$0xff]
        %vm432 = vcmask 261120
        %v434 = vsel %vm432, %v334, 0
        %v437 = vsel %vm432, %v424, 0
        %v440 = vsel %vm432, %v425, 0
        %v443 = vsel %vm432, %v426, 0
        %v446 = vsel %vm432, %v427, 0
        %v449 = vsel %vm432, %v428, 0
        %v452 = vsel %vm432, %v429, 0
        %v455 = vsel %vm432, %v430, 0
        %v458 = vsel %vm432, %v431, 0
        %460 = vmatprep.subr.mxu0 0.0
        %461 = vmatpush1.xpose.msra.mxu0 0.0
        %462 = vmatprep.subr.mxu0 0.0
        %463 = vmatpush1.xpose.msra.mxu0 0.0
        %464 = vmatprep.subr.mxu0 0.0
        %465 = vmatpush1.xpose.msra.mxu0 0.0
        %466 = vmatprep.subr.mxu0 0.0
        %467 = vmatpush1.xpose.msra.mxu0 0.0
        %468 = vmatprep.subr.mxu0 0.0
        %469 = vmatpush1.xpose.msra.mxu0 0.0
        %470 = vmatprep.subr.mxu0 0.0
        %471 = vmatpush1.xpose.msra.mxu0 0.0
        %472 = vmatprep.subr.mxu0 0.0
        %473 = vmatpush1.xpose.msra.mxu0 0.0
        %474 = vmatprep.subr.mxu0 0.0
        %475 = vmatpush1.xpose.msra.mxu0 0.0
        %476 = vmatprep.subr.mxu0 0.0
        %477 = vmatpush1.xpose.msra.mxu0 %v458
        %478 = vmatprep.subr.mxu0 0.0
        %479 = vmatpush1.xpose.msra.mxu0 %v455
        %480 = vmatprep.subr.mxu0 0.0
        %481 = vmatpush1.xpose.msra.mxu0 %v452
        %482 = vmatprep.subr.mxu0 0.0
        %483 = vmatpush1.xpose.msra.mxu0 %v449
        %484 = vmatprep.subr.mxu0 0.0
        %485 = vmatpush1.xpose.msra.mxu0 %v446
        %486 = vmatprep.subr.mxu0 0.0
        %487 = vmatpush1.xpose.msra.mxu0 %v443
        %488 = vmatprep.subr.mxu0 0.0
        %489 = vmatpush1.xpose.msra.mxu0 %v440
        %490 = vmatprep.subr.mxu0 0.0
        %491 = vmatpush1.xpose.msra.mxu0 %v437
        %492 = vmatprep.subr.mxu0 0.0
        %493 = vmatpush2.xpose.msra.mxu0 0.0
        %494 = vmatprep.subr.mxu0 0.0
        %495 = vmatpush2.xpose.msra.mxu0 0.0
        %496 = vmatprep.subr.mxu0 0.0
        %497 = vmatpush2.xpose.msra.mxu0 0.0
        %498 = vmatprep.subr.mxu0 0.0
        %499 = vmatpush2.xpose.msra.mxu0 0.0
        %500 = vmatprep.subr.mxu0 0.0
        %501 = vmatpush2.xpose.msra.mxu0 0.0
        %502 = vmatprep.subr.mxu0 0.0
        %503 = vmatpush2.xpose.msra.mxu0 0.0
        %504 = vmatprep.subr.mxu0 0.0
        %505 = vmatpush2.xpose.msra.mxu0 0.0
        %506 = vmatprep.subr.mxu0 0.0
        %507 = vmatpush2.xpose.msra.mxu0 0.0
        %508 = vmatprep.subr.mxu0 0.0
        %509 = vmatpush2.xpose.msra.mxu0 0.0
        %510 = vmatprep.subr.mxu0 0.0
        %511 = vmatpush2.xpose.msra.mxu0 0.0
        %512 = vmatprep.subr.mxu0 0.0
        %513 = vmatpush2.xpose.msra.mxu0 0.0
        %514 = vmatprep.subr.mxu0 0.0
        %515 = vmatpush2.xpose.msra.mxu0 0.0
        %516 = vmatprep.subr.mxu0 0.0
        %517 = vmatpush2.xpose.msra.mxu0 0.0
        %518 = vmatprep.subr.mxu0 0.0
        %519 = vmatpush2.xpose.msra.mxu0 0.0
        %520 = vmatprep.subr.mxu0 0.0
        %521 = vmatpush2.xpose.msra.mxu0 0.0
        %522 = vmatprep.subr.mxu0 0.0
        %523 = vmatpush2.xpose.msra.mxu0 0.0
        %524 = vmatprep.mubr.f32.mxu0 0.0
        %525 = vmatmul.mubr.f32.gmra.mxu0 %v434
        %v526 = vpop.f32.mrf.mxu0
        %v527 = vadd.f32 0.0, %v526
        %v528 = vpop.f32.mrf.mxu0
        %529 = vdwg.mxu0
        %v530 = vmul.f32 %v421, 0.35355338
        %v531 = vlaneseq
        %v532 = vshrl.u32 %v531, 7
        %v533 = vld [vmem:[%s6] sm:$0xff]
        %v534 = vld [vmem:[%s6 + $0x8] sm:$0xff]
        %v535 = vld [vmem:[%s6 + $0x10] sm:$0xff]
        %v536 = vld [vmem:[%s6 + $0x18] sm:$0xff]
        %s537 = sld [smem:[#allocation3 + %s32]]
        %v538 = vstv %s537
        %vm539 = vcmp.lt.s32.totalorder %v532, %v538
        %vm540 = vcmask 64512
        %v542 = vsel %vm540, %v530, 0
        %v545 = vsel %vm540, %v527, 0
        %547 = vmatprep.subr.mxu0 0.0
        %548 = vmatpush1.xpose.msra.mxu0 0.0
        %549 = vmatprep.subr.mxu0 0.0
        %550 = vmatpush1.xpose.msra.mxu0 0.0
        %551 = vmatprep.subr.mxu0 0.0
        %552 = vmatpush1.xpose.msra.mxu0 0.0
        %553 = vmatprep.subr.mxu0 0.0
        %554 = vmatpush1.xpose.msra.mxu0 0.0
        %555 = vmatprep.subr.mxu0 0.0
        %556 = vmatpush1.xpose.msra.mxu0 0.0
        %557 = vmatprep.subr.mxu0 0.0
        %558 = vmatpush1.xpose.msra.mxu0 0.0
        %559 = vmatprep.subr.mxu0 0.0
        %560 = vmatpush1.xpose.msra.mxu0 0.0
        %561 = vmatprep.subr.mxu0 0.0
        %562 = vmatpush1.xpose.msra.mxu0 0.0
        %563 = vmatprep.subr.mxu0 0.0
        %564 = vmatpush1.xpose.msra.mxu0 0.0
        %565 = vmatprep.subr.mxu0 0.0
        %566 = vmatpush1.xpose.msra.mxu0 0.0
        %567 = vmatprep.subr.mxu0 0.0
        %568 = vmatpush1.xpose.msra.mxu0 0.0
        %569 = vmatprep.subr.mxu0 0.0
        %570 = vmatpush1.xpose.msra.mxu0 0.0
        %571 = vmatprep.subr.mxu0 0.0
        %572 = vmatpush1.xpose.msra.mxu0 0.0
        %573 = vmatprep.subr.mxu0 0.0
        %574 = vmatpush1.xpose.msra.mxu0 0.0
        %575 = vmatprep.subr.mxu0 0.0
        %576 = vmatpush1.xpose.msra.mxu0 0.0
        %577 = vmatprep.subr.mxu0 0.0
        %578 = vmatpush1.xpose.msra.mxu0 %v545
        %579 = vmatprep.subr.mxu0 0.0
        %580 = vmatpush2.xpose.msra.mxu0 0.0
        %581 = vmatprep.subr.mxu0 0.0
        %582 = vmatpush2.xpose.msra.mxu0 0.0
        %583 = vmatprep.subr.mxu0 0.0
        %584 = vmatpush2.xpose.msra.mxu0 0.0
        %585 = vmatprep.subr.mxu0 0.0
        %586 = vmatpush2.xpose.msra.mxu0 0.0
        %587 = vmatprep.subr.mxu0 0.0
        %588 = vmatpush2.xpose.msra.mxu0 0.0
        %589 = vmatprep.subr.mxu0 0.0
        %590 = vmatpush2.xpose.msra.mxu0 0.0
        %591 = vmatprep.subr.mxu0 0.0
        %592 = vmatpush2.xpose.msra.mxu0 0.0
        %593 = vmatprep.subr.mxu0 0.0
        %594 = vmatpush2.xpose.msra.mxu0 0.0
        %595 = vmatprep.subr.mxu0 0.0
        %596 = vmatpush2.xpose.msra.mxu0 0.0
        %597 = vmatprep.subr.mxu0 0.0
        %598 = vmatpush2.xpose.msra.mxu0 0.0
        %599 = vmatprep.subr.mxu0 0.0
        %600 = vmatpush2.xpose.msra.mxu0 0.0
        %601 = vmatprep.subr.mxu0 0.0
        %602 = vmatpush2.xpose.msra.mxu0 0.0
        %603 = vmatprep.subr.mxu0 0.0
        %604 = vmatpush2.xpose.msra.mxu0 0.0
        %605 = vmatprep.subr.mxu0 0.0
        %606 = vmatpush2.xpose.msra.mxu0 0.0
        %607 = vmatprep.subr.mxu0 0.0
        %608 = vmatpush2.xpose.msra.mxu0 0.0
        %609 = vmatprep.subr.mxu0 0.0
        %610 = vmatpush2.xpose.msra.mxu0 0.0
        %611 = vmatprep.mubr.f32.mxu0 0.0
        %612 = vmatmul.mubr.f32.gmra.mxu0 %v542
        %v613 = vpop.f32.mrf.mxu0
        %v614 = vadd.f32 0.0, %v613
        %v615 = vpop.f32.mrf.mxu0
        %616 = vdwg.mxu0
        %v617 = vsel %vm539, 1, 0
        %vm618 = vcmp.eq.s32.totalorder %v617, 1
        %v619 = vsel %vm618, %v614, -1000000.0
        %v620 = vsel %vm540, %v619, -inf
        %v621 = vrot.slane %v620, 4
        %v622 = vmax.f32 %v620, %v621
        %v623 = vrot.slane %v622, 2
        %v624 = vmax.f32 %v622, %v623
        %v625 = vrot.slane %v624, 1
        %v626 = vmax.f32 %v624, %v625
        %v627 = vsub.f32 %v619, %v626
        %v628 = vmul.f32 %v627, 1.442695
        %v629 = vpow.pop %v628
        %v630 = vsel %vm540, %v629, 0.0
        %v631 = vrot.slane %v630, 4
        %v632 = vadd.f32 %v630, %v631
        %v633 = vrot.slane %v632, 2
        %v634 = vadd.f32 %v632, %v633
        %v635 = vrot.slane %v634, 1
        %v636 = vadd.f32 %v634, %v635
        %v637 = vrcp.pop %v636
        %v638 = vmul.f32 %v629, %v637
        %639 = vrot.lane.b32.xlu0 %v527, 96
        %v640 = vpop.permute.xlu0 %639
        %v643 = vsel %vm540, %v638, 0
        %645 = vmatprep.subr.mxu0 0.0
        %646 = vmatpush1.msra.mxu0 0.0
        %647 = vmatprep.subr.mxu0 0.0
        %648 = vmatpush1.msra.mxu0 0.0
        %649 = vmatprep.subr.mxu0 0.0
        %650 = vmatpush1.msra.mxu0 0.0
        %651 = vmatprep.subr.mxu0 0.0
        %652 = vmatpush1.msra.mxu0 0.0
        %653 = vmatprep.subr.mxu0 0.0
        %654 = vmatpush1.msra.mxu0 0.0
        %655 = vmatprep.subr.mxu0 0.0
        %656 = vmatpush1.msra.mxu0 0.0
        %657 = vmatprep.subr.mxu0 0.0
        %658 = vmatpush1.msra.mxu0 0.0
        %659 = vmatprep.subr.mxu0 0.0
        %660 = vmatpush1.msra.mxu0 0.0
        %661 = vmatprep.subr.mxu0 0.0
        %662 = vmatpush1.msra.mxu0 0.0
        %663 = vmatprep.subr.mxu0 0.0
        %664 = vmatpush1.msra.mxu0 0.0
        %665 = vmatprep.subr.mxu0 0.0
        %666 = vmatpush1.msra.mxu0 0.0
        %667 = vmatprep.subr.mxu0 0.0
        %668 = vmatpush1.msra.mxu0 0.0
        %669 = vmatprep.subr.mxu0 0.0
        %670 = vmatpush1.msra.mxu0 0.0
        %671 = vmatprep.subr.mxu0 0.0
        %672 = vmatpush1.msra.mxu0 0.0
        %673 = vmatprep.subr.mxu0 0.0
        %674 = vmatpush1.msra.mxu0 0.0
        %675 = vmatprep.subr.mxu0 0.0
        %676 = vmatpush1.msra.mxu0 %v640
        %677 = vmatprep.subr.mxu0 0.0
        %678 = vmatpush2.msra.mxu0 0.0
        %679 = vmatprep.subr.mxu0 0.0
        %680 = vmatpush2.msra.mxu0 0.0
        %681 = vmatprep.subr.mxu0 0.0
        %682 = vmatpush2.msra.mxu0 0.0
        %683 = vmatprep.subr.mxu0 0.0
        %684 = vmatpush2.msra.mxu0 0.0
        %685 = vmatprep.subr.mxu0 0.0
        %686 = vmatpush2.msra.mxu0 0.0
        %687 = vmatprep.subr.mxu0 0.0
        %688 = vmatpush2.msra.mxu0 0.0
        %689 = vmatprep.subr.mxu0 0.0
        %690 = vmatpush2.msra.mxu0 0.0
        %691 = vmatprep.subr.mxu0 0.0
        %692 = vmatpush2.msra.mxu0 0.0
        %693 = vmatprep.subr.mxu0 0.0
        %694 = vmatpush2.msra.mxu0 0.0
        %695 = vmatprep.subr.mxu0 0.0
        %696 = vmatpush2.msra.mxu0 0.0
        %697 = vmatprep.subr.mxu0 0.0
        %698 = vmatpush2.msra.mxu0 0.0
        %699 = vmatprep.subr.mxu0 0.0
        %700 = vmatpush2.msra.mxu0 0.0
        %701 = vmatprep.subr.mxu0 0.0
        %702 = vmatpush2.msra.mxu0 0.0
        %703 = vmatprep.subr.mxu0 0.0
        %704 = vmatpush2.msra.mxu0 0.0
        %705 = vmatprep.subr.mxu0 0.0
        %706 = vmatpush2.msra.mxu0 0.0
        %707 = vmatprep.subr.mxu0 0.0
        %708 = vmatpush2.msra.mxu0 0.0
        %709 = vmatprep.mubr.f32.mxu0 0.0
        %710 = vmatmul.mubr.f32.gmra.mxu0 %v643
        %v711 = vpop.f32.mrf.mxu0
        %v712 = vadd.f32 0.0, %v711
        %v713 = vpop.f32.mrf.mxu0
        %714 = vdwg.mxu0
        %715 = vrot.lane.b32.xlu0 %v530, 120
        %v716 = vpop.permute.xlu0 %715
        %717 = vrot.lane.b32.xlu0 %v527, 120
        %v718 = vpop.permute.xlu0 %717
        %v719 = vsel %vm540, %v716, 0
        %v721 = vsel %vm540, %v718, 0
        %723 = vmatprep.subr.mxu0 0.0
        %724 = vmatpush1.xpose.msra.mxu0 0.0
        %725 = vmatprep.subr.mxu0 0.0
        %726 = vmatpush1.xpose.msra.mxu0 0.0
        %727 = vmatprep.subr.mxu0 0.0
        %728 = vmatpush1.xpose.msra.mxu0 0.0
        %729 = vmatprep.subr.mxu0 0.0
        %730 = vmatpush1.xpose.msra.mxu0 0.0
        %731 = vmatprep.subr.mxu0 0.0
        %732 = vmatpush1.xpose.msra.mxu0 0.0
        %733 = vmatprep.subr.mxu0 0.0
        %734 = vmatpush1.xpose.msra.mxu0 0.0
        %735 = vmatprep.subr.mxu0 0.0
        %736 = vmatpush1.xpose.msra.mxu0 0.0
        %737 = vmatprep.subr.mxu0 0.0
        %738 = vmatpush1.xpose.msra.mxu0 0.0
        %739 = vmatprep.subr.mxu0 0.0
        %740 = vmatpush1.xpose.msra.mxu0 0.0
        %741 = vmatprep.subr.mxu0 0.0
        %742 = vmatpush1.xpose.msra.mxu0 0.0
        %743 = vmatprep.subr.mxu0 0.0
        %744 = vmatpush1.xpose.msra.mxu0 0.0
        %745 = vmatprep.subr.mxu0 0.0
        %746 = vmatpush1.xpose.msra.mxu0 0.0
        %747 = vmatprep.subr.mxu0 0.0
        %748 = vmatpush1.xpose.msra.mxu0 0.0
        %749 = vmatprep.subr.mxu0 0.0
        %750 = vmatpush1.xpose.msra.mxu0 0.0
        %751 = vmatprep.subr.mxu0 0.0
        %752 = vmatpush1.xpose.msra.mxu0 0.0
        %753 = vmatprep.subr.mxu0 0.0
        %754 = vmatpush1.xpose.msra.mxu0 %v721
        %755 = vmatprep.subr.mxu0 0.0
        %756 = vmatpush2.xpose.msra.mxu0 0.0
        %757 = vmatprep.subr.mxu0 0.0
        %758 = vmatpush2.xpose.msra.mxu0 0.0
        %759 = vmatprep.subr.mxu0 0.0
        %760 = vmatpush2.xpose.msra.mxu0 0.0
        %761 = vmatprep.subr.mxu0 0.0
        %762 = vmatpush2.xpose.msra.mxu0 0.0
        %763 = vmatprep.subr.mxu0 0.0
        %764 = vmatpush2.xpose.msra.mxu0 0.0
        %765 = vmatprep.subr.mxu0 0.0
        %766 = vmatpush2.xpose.msra.mxu0 0.0
        %767 = vmatprep.subr.mxu0 0.0
        %768 = vmatpush2.xpose.msra.mxu0 0.0
        %769 = vmatprep.subr.mxu0 0.0
        %770 = vmatpush2.xpose.msra.mxu0 0.0
        %771 = vmatprep.subr.mxu0 0.0
        %772 = vmatpush2.xpose.msra.mxu0 0.0
        %773 = vmatprep.subr.mxu0 0.0
        %774 = vmatpush2.xpose.msra.mxu0 0.0
        %775 = vmatprep.subr.mxu0 0.0
        %776 = vmatpush2.xpose.msra.mxu0 0.0
        %777 = vmatprep.subr.mxu0 0.0
        %778 = vmatpush2.xpose.msra.mxu0 0.0
        %779 = vmatprep.subr.mxu0 0.0
        %780 = vmatpush2.xpose.msra.mxu0 0.0
        %781 = vmatprep.subr.mxu0 0.0
        %782 = vmatpush2.xpose.msra.mxu0 0.0
        %783 = vmatprep.subr.mxu0 0.0
        %784 = vmatpush2.xpose.msra.mxu0 0.0
        %785 = vmatprep.subr.mxu0 0.0
        %786 = vmatpush2.xpose.msra.mxu0 0.0
        %787 = vmatprep.mubr.f32.mxu0 0.0
        %788 = vmatmul.mubr.f32.gmra.mxu0 %v719
        %v789 = vpop.f32.mrf.mxu0
        %v790 = vadd.f32 0.0, %v789
        %v791 = vpop.f32.mrf.mxu0
        %792 = vdwg.mxu0
        %v793 = vsel %vm618, %v790, -1000000.0
        %v794 = vsel %vm540, %v793, -inf
        %v795 = vrot.slane %v794, 4
        %v796 = vmax.f32 %v794, %v795
        %v797 = vrot.slane %v796, 2
        %v798 = vmax.f32 %v796, %v797
        %v799 = vrot.slane %v798, 1
        %v800 = vmax.f32 %v798, %v799
        %v801 = vsub.f32 %v793, %v800
        %v802 = vmul.f32 %v801, 1.442695
        %v803 = vpow.pop %v802
        %v804 = vsel %vm540, %v803, 0.0
        %v805 = vrot.slane %v804, 4
        %v806 = vadd.f32 %v804, %v805
        %v807 = vrot.slane %v806, 2
        %v808 = vadd.f32 %v806, %v807
        %v809 = vrot.slane %v808, 1
        %v810 = vadd.f32 %v808, %v809
        %v811 = vrcp.pop %v810
        %v812 = vmul.f32 %v803, %v811
        %813 = vrot.lane.b32.xlu0 %v527, 88
        %v814 = vpop.permute.xlu0 %813
        %v817 = vsel %vm540, %v812, 0
        %819 = vmatprep.subr.mxu0 0.0
        %820 = vmatpush1.msra.mxu0 0.0
        %821 = vmatprep.subr.mxu0 0.0
        %822 = vmatpush1.msra.mxu0 0.0
        %823 = vmatprep.subr.mxu0 0.0
        %824 = vmatpush1.msra.mxu0 0.0
        %825 = vmatprep.subr.mxu0 0.0
        %826 = vmatpush1.msra.mxu0 0.0
        %827 = vmatprep.subr.mxu0 0.0
        %828 = vmatpush1.msra.mxu0 0.0
        %829 = vmatprep.subr.mxu0 0.0
        %830 = vmatpush1.msra.mxu0 0.0
        %831 = vmatprep.subr.mxu0 0.0
        %832 = vmatpush1.msra.mxu0 0.0
        %833 = vmatprep.subr.mxu0 0.0
        %834 = vmatpush1.msra.mxu0 0.0
        %835 = vmatprep.subr.mxu0 0.0
        %836 = vmatpush1.msra.mxu0 0.0
        %837 = vmatprep.subr.mxu0 0.0
        %838 = vmatpush1.msra.mxu0 0.0
        %839 = vmatprep.subr.mxu0 0.0
        %840 = vmatpush1.msra.mxu0 0.0
        %841 = vmatprep.subr.mxu0 0.0
        %842 = vmatpush1.msra.mxu0 0.0
        %843 = vmatprep.subr.mxu0 0.0
        %844 = vmatpush1.msra.mxu0 0.0
        %845 = vmatprep.subr.mxu0 0.0
        %846 = vmatpush1.msra.mxu0 0.0
        %847 = vmatprep.subr.mxu0 0.0
        %848 = vmatpush1.msra.mxu0 0.0
        %849 = vmatprep.subr.mxu0 0.0
        %850 = vmatpush1.msra.mxu0 %v814
        %851 = vmatprep.subr.mxu0 0.0
        %852 = vmatpush2.msra.mxu0 0.0
        %853 = vmatprep.subr.mxu0 0.0
        %854 = vmatpush2.msra.mxu0 0.0
        %855 = vmatprep.subr.mxu0 0.0
        %856 = vmatpush2.msra.mxu0 0.0
        %857 = vmatprep.subr.mxu0 0.0
        %858 = vmatpush2.msra.mxu0 0.0
        %859 = vmatprep.subr.mxu0 0.0
        %860 = vmatpush2.msra.mxu0 0.0
        %861 = vmatprep.subr.mxu0 0.0
        %862 = vmatpush2.msra.mxu0 0.0
        %863 = vmatprep.subr.mxu0 0.0
        %864 = vmatpush2.msra.mxu0 0.0
        %865 = vmatprep.subr.mxu0 0.0
        %866 = vmatpush2.msra.mxu0 0.0
        %867 = vmatprep.subr.mxu0 0.0
        %868 = vmatpush2.msra.mxu0 0.0
        %869 = vmatprep.subr.mxu0 0.0
        %870 = vmatpush2.msra.mxu0 0.0
        %871 = vmatprep.subr.mxu0 0.0
        %872 = vmatpush2.msra.mxu0 0.0
        %873 = vmatprep.subr.mxu0 0.0
        %874 = vmatpush2.msra.mxu0 0.0
        %875 = vmatprep.subr.mxu0 0.0
        %876 = vmatpush2.msra.mxu0 0.0
        %877 = vmatprep.subr.mxu0 0.0
        %878 = vmatpush2.msra.mxu0 0.0
        %879 = vmatprep.subr.mxu0 0.0
        %880 = vmatpush2.msra.mxu0 0.0
        %881 = vmatprep.subr.mxu0 0.0
        %882 = vmatpush2.msra.mxu0 0.0
        %883 = vmatprep.mubr.f32.mxu0 0.0
        %884 = vmatmul.mubr.f32.gmra.mxu0 %v817
        %v885 = vpop.f32.mrf.mxu0
        %v886 = vadd.f32 0.0, %v885
        %v887 = vpop.f32.mrf.mxu0
        %888 = vdwg.mxu0
        %893 = vrot.lane.b32.xlu0 %v533, 120
        %v894 = vpop.permute.xlu0 %893
        %895 = vrot.lane.b32.xlu0 %v534, 120
        %v896 = vpop.permute.xlu0 %895
        %897 = vrot.lane.b32.xlu0 %v535, 120
        %v898 = vpop.permute.xlu0 %897
        %899 = vrot.lane.b32.xlu0 %v536, 120
        %v900 = vpop.permute.xlu0 %899
        %v902 = vsel %vm540, %v886, 0
        %v904 = vsel %vm540, %v894, 0
        %v906 = vsel %vm540, %v896, 0
        %v908 = vsel %vm540, %v898, 0
        %v910 = vsel %vm540, %v900, 0
        %912 = vmatprep.subr.mxu0 0.0
        %913 = vmatpush1.xpose.msra.mxu0 0.0
        %914 = vmatprep.subr.mxu0 0.0
        %915 = vmatpush1.xpose.msra.mxu0 0.0
        %916 = vmatprep.subr.mxu0 0.0
        %917 = vmatpush1.xpose.msra.mxu0 0.0
        %918 = vmatprep.subr.mxu0 0.0
        %919 = vmatpush1.xpose.msra.mxu0 0.0
        %920 = vmatprep.subr.mxu0 0.0
        %921 = vmatpush1.xpose.msra.mxu0 0.0
        %922 = vmatprep.subr.mxu0 0.0
        %923 = vmatpush1.xpose.msra.mxu0 0.0
        %924 = vmatprep.subr.mxu0 0.0
        %925 = vmatpush1.xpose.msra.mxu0 0.0
        %926 = vmatprep.subr.mxu0 0.0
        %927 = vmatpush1.xpose.msra.mxu0 0.0
        %928 = vmatprep.subr.mxu0 0.0
        %929 = vmatpush1.xpose.msra.mxu0 0.0
        %930 = vmatprep.subr.mxu0 0.0
        %931 = vmatpush1.xpose.msra.mxu0 0.0
        %932 = vmatprep.subr.mxu0 0.0
        %933 = vmatpush1.xpose.msra.mxu0 0.0
        %934 = vmatprep.subr.mxu0 0.0
        %935 = vmatpush1.xpose.msra.mxu0 0.0
        %936 = vmatprep.subr.mxu0 0.0
        %937 = vmatpush1.xpose.msra.mxu0 %v910
        %938 = vmatprep.subr.mxu0 0.0
        %939 = vmatpush1.xpose.msra.mxu0 %v908
        %940 = vmatprep.subr.mxu0 0.0
        %941 = vmatpush1.xpose.msra.mxu0 %v906
        %942 = vmatprep.subr.mxu0 0.0
        %943 = vmatpush1.xpose.msra.mxu0 %v904
        %944 = vmatprep.subr.mxu0 0.0
        %945 = vmatpush2.xpose.msra.mxu0 0.0
        %946 = vmatprep.subr.mxu0 0.0
        %947 = vmatpush2.xpose.msra.mxu0 0.0
        %948 = vmatprep.subr.mxu0 0.0
        %949 = vmatpush2.xpose.msra.mxu0 0.0
        %950 = vmatprep.subr.mxu0 0.0
        %951 = vmatpush2.xpose.msra.mxu0 0.0
        %952 = vmatprep.subr.mxu0 0.0
        %953 = vmatpush2.xpose.msra.mxu0 0.0
        %954 = vmatprep.subr.mxu0 0.0
        %955 = vmatpush2.xpose.msra.mxu0 0.0
        %956 = vmatprep.subr.mxu0 0.0
        %957 = vmatpush2.xpose.msra.mxu0 0.0
        %958 = vmatprep.subr.mxu0 0.0
        %959 = vmatpush2.xpose.msra.mxu0 0.0
        %960 = vmatprep.subr.mxu0 0.0
        %961 = vmatpush2.xpose.msra.mxu0 0.0
        %962 = vmatprep.subr.mxu0 0.0
        %963 = vmatpush2.xpose.msra.mxu0 0.0
        %964 = vmatprep.subr.mxu0 0.0
        %965 = vmatpush2.xpose.msra.mxu0 0.0
        %966 = vmatprep.subr.mxu0 0.0
        %967 = vmatpush2.xpose.msra.mxu0 0.0
        %968 = vmatprep.subr.mxu0 0.0
        %969 = vmatpush2.xpose.msra.mxu0 0.0
        %970 = vmatprep.subr.mxu0 0.0
        %971 = vmatpush2.xpose.msra.mxu0 0.0
        %972 = vmatprep.subr.mxu0 0.0
        %973 = vmatpush2.xpose.msra.mxu0 0.0
        %974 = vmatprep.subr.mxu0 0.0
        %975 = vmatpush2.xpose.msra.mxu0 0.0
        %976 = vmatprep.mubr.f32.mxu0 0.0
        %977 = vmatmul.mubr.f32.gmra.mxu0 %v902
        %v978 = vpop.f32.mrf.mxu0
        %v979 = vadd.f32 0.0, %v978
        %v980 = vpop.f32.mrf.mxu0
        %981 = vdwg.mxu0
        %v983 = vsel %vm540, %v712, 0
        %v985 = vsel %vm540, %v533, 0
        %v987 = vsel %vm540, %v534, 0
        %v989 = vsel %vm540, %v535, 0
        %v991 = vsel %vm540, %v536, 0
        %993 = vmatprep.subr.mxu0 0.0
        %994 = vmatpush1.xpose.msra.mxu0 0.0
        %995 = vmatprep.subr.mxu0 0.0
        %996 = vmatpush1.xpose.msra.mxu0 0.0
        %997 = vmatprep.subr.mxu0 0.0
        %998 = vmatpush1.xpose.msra.mxu0 0.0
        %999 = vmatprep.subr.mxu0 0.0
        %1000 = vmatpush1.xpose.msra.mxu0 0.0
        %1001 = vmatprep.subr.mxu0 0.0
        %1002 = vmatpush1.xpose.msra.mxu0 0.0
        %1003 = vmatprep.subr.mxu0 0.0
        %1004 = vmatpush1.xpose.msra.mxu0 0.0
        %1005 = vmatprep.subr.mxu0 0.0
        %1006 = vmatpush1.xpose.msra.mxu0 0.0
        %1007 = vmatprep.subr.mxu0 0.0
        %1008 = vmatpush1.xpose.msra.mxu0 0.0
        %1009 = vmatprep.subr.mxu0 0.0
        %1010 = vmatpush1.xpose.msra.mxu0 0.0
        %1011 = vmatprep.subr.mxu0 0.0
        %1012 = vmatpush1.xpose.msra.mxu0 0.0
        %1013 = vmatprep.subr.mxu0 0.0
        %1014 = vmatpush1.xpose.msra.mxu0 0.0
        %1015 = vmatprep.subr.mxu0 0.0
        %1016 = vmatpush1.xpose.msra.mxu0 0.0
        %1017 = vmatprep.subr.mxu0 0.0
        %1018 = vmatpush1.xpose.msra.mxu0 %v991
        %1019 = vmatprep.subr.mxu0 0.0
        %1020 = vmatpush1.xpose.msra.mxu0 %v989
        %1021 = vmatprep.subr.mxu0 0.0
        %1022 = vmatpush1.xpose.msra.mxu0 %v987
        %1023 = vmatprep.subr.mxu0 0.0
        %1024 = vmatpush1.xpose.msra.mxu0 %v985
        %1025 = vmatprep.subr.mxu0 0.0
        %1026 = vmatpush2.xpose.msra.mxu0 0.0
        %1027 = vmatprep.subr.mxu0 0.0
        %1028 = vmatpush2.xpose.msra.mxu0 0.0
        %1029 = vmatprep.subr.mxu0 0.0
        %1030 = vmatpush2.xpose.msra.mxu0 0.0
        %1031 = vmatprep.subr.mxu0 0.0
        %1032 = vmatpush2.xpose.msra.mxu0 0.0
        %1033 = vmatprep.subr.mxu0 0.0
        %1034 = vmatpush2.xpose.msra.mxu0 0.0
        %1035 = vmatprep.subr.mxu0 0.0
        %1036 = vmatpush2.xpose.msra.mxu0 0.0
        %1037 = vmatprep.subr.mxu0 0.0
        %1038 = vmatpush2.xpose.msra.mxu0 0.0
        %1039 = vmatprep.subr.mxu0 0.0
        %1040 = vmatpush2.xpose.msra.mxu0 0.0
        %1041 = vmatprep.subr.mxu0 0.0
        %1042 = vmatpush2.xpose.msra.mxu0 0.0
        %1043 = vmatprep.subr.mxu0 0.0
        %1044 = vmatpush2.xpose.msra.mxu0 0.0
        %1045 = vmatprep.subr.mxu0 0.0
        %1046 = vmatpush2.xpose.msra.mxu0 0.0
        %1047 = vmatprep.subr.mxu0 0.0
        %1048 = vmatpush2.xpose.msra.mxu0 0.0
        %1049 = vmatprep.subr.mxu0 0.0
        %1050 = vmatpush2.xpose.msra.mxu0 0.0
        %1051 = vmatprep.subr.mxu0 0.0
        %1052 = vmatpush2.xpose.msra.mxu0 0.0
        %1053 = vmatprep.subr.mxu0 0.0
        %1054 = vmatpush2.xpose.msra.mxu0 0.0
        %1055 = vmatprep.subr.mxu0 0.0
        %1056 = vmatpush2.xpose.msra.mxu0 0.0
        %1057 = vmatprep.mubr.f32.mxu0 0.0
        %1058 = vmatmul.mubr.f32.gmra.mxu0 %v983
        %v1059 = vpop.f32.mrf.mxu0
        %v1060 = vadd.f32 %v979, %v1059
        %v1061 = vpop.f32.mrf.mxu0
        %1062 = vdwg.mxu0
        %1063 = vrot.lane.b32.xlu0 %v530, 112
        %v1064 = vpop.permute.xlu0 %1063
        %1065 = vrot.lane.b32.xlu0 %v527, 112
        %v1066 = vpop.permute.xlu0 %1065
        %v1067 = vsel %vm540, %v1064, 0
        %v1069 = vsel %vm540, %v1066, 0
        %1071 = vmatprep.subr.mxu0 0.0
        %1072 = vmatpush1.xpose.msra.mxu0 0.0
        %1073 = vmatprep.subr.mxu0 0.0
        %1074 = vmatpush1.xpose.msra.mxu0 0.0
        %1075 = vmatprep.subr.mxu0 0.0
        %1076 = vmatpush1.xpose.msra.mxu0 0.0
        %1077 = vmatprep.subr.mxu0 0.0
        %1078 = vmatpush1.xpose.msra.mxu0 0.0
        %1079 = vmatprep.subr.mxu0 0.0
        %1080 = vmatpush1.xpose.msra.mxu0 0.0
        %1081 = vmatprep.subr.mxu0 0.0
        %1082 = vmatpush1.xpose.msra.mxu0 0.0
        %1083 = vmatprep.subr.mxu0 0.0
        %1084 = vmatpush1.xpose.msra.mxu0 0.0
        %1085 = vmatprep.subr.mxu0 0.0
        %1086 = vmatpush1.xpose.msra.mxu0 0.0
        %1087 = vmatprep.subr.mxu0 0.0
        %1088 = vmatpush1.xpose.msra.mxu0 0.0
        %1089 = vmatprep.subr.mxu0 0.0
        %1090 = vmatpush1.xpose.msra.mxu0 0.0
        %1091 = vmatprep.subr.mxu0 0.0
        %1092 = vmatpush1.xpose.msra.mxu0 0.0
        %1093 = vmatprep.subr.mxu0 0.0
        %1094 = vmatpush1.xpose.msra.mxu0 0.0
        %1095 = vmatprep.subr.mxu0 0.0
        %1096 = vmatpush1.xpose.msra.mxu0 0.0
        %1097 = vmatprep.subr.mxu0 0.0
        %1098 = vmatpush1.xpose.msra.mxu0 0.0
        %1099 = vmatprep.subr.mxu0 0.0
        %1100 = vmatpush1.xpose.msra.mxu0 0.0
        %1101 = vmatprep.subr.mxu0 0.0
        %1102 = vmatpush1.xpose.msra.mxu0 %v1069
        %1103 = vmatprep.subr.mxu0 0.0
        %1104 = vmatpush2.xpose.msra.mxu0 0.0
        %1105 = vmatprep.subr.mxu0 0.0
        %1106 = vmatpush2.xpose.msra.mxu0 0.0
        %1107 = vmatprep.subr.mxu0 0.0
        %1108 = vmatpush2.xpose.msra.mxu0 0.0
        %1109 = vmatprep.subr.mxu0 0.0
        %1110 = vmatpush2.xpose.msra.mxu0 0.0
        %1111 = vmatprep.subr.mxu0 0.0
        %1112 = vmatpush2.xpose.msra.mxu0 0.0
        %1113 = vmatprep.subr.mxu0 0.0
        %1114 = vmatpush2.xpose.msra.mxu0 0.0
        %1115 = vmatprep.subr.mxu0 0.0
        %1116 = vmatpush2.xpose.msra.mxu0 0.0
        %1117 = vmatprep.subr.mxu0 0.0
        %1118 = vmatpush2.xpose.msra.mxu0 0.0
        %1119 = vmatprep.subr.mxu0 0.0
        %1120 = vmatpush2.xpose.msra.mxu0 0.0
        %1121 = vmatprep.subr.mxu0 0.0
        %1122 = vmatpush2.xpose.msra.mxu0 0.0
        %1123 = vmatprep.subr.mxu0 0.0
        %1124 = vmatpush2.xpose.msra.mxu0 0.0
        %1125 = vmatprep.subr.mxu0 0.0
        %1126 = vmatpush2.xpose.msra.mxu0 0.0
        %1127 = vmatprep.subr.mxu0 0.0
        %1128 = vmatpush2.xpose.msra.mxu0 0.0
        %1129 = vmatprep.subr.mxu0 0.0
        %1130 = vmatpush2.xpose.msra.mxu0 0.0
        %1131 = vmatprep.subr.mxu0 0.0
        %1132 = vmatpush2.xpose.msra.mxu0 0.0
        %1133 = vmatprep.subr.mxu0 0.0
        %1134 = vmatpush2.xpose.msra.mxu0 0.0
        %1135 = vmatprep.mubr.f32.mxu0 0.0
        %1136 = vmatmul.mubr.f32.gmra.mxu0 %v1067
        %v1137 = vpop.f32.mrf.mxu0
        %v1138 = vadd.f32 0.0, %v1137
        %v1139 = vpop.f32.mrf.mxu0
        %1140 = vdwg.mxu0
        %v1141 = vsel %vm618, %v1138, -1000000.0
        %v1142 = vsel %vm540, %v1141, -inf
        %v1143 = vrot.slane %v1142, 4
        %v1144 = vmax.f32 %v1142, %v1143
        %v1145 = vrot.slane %v1144, 2
        %v1146 = vmax.f32 %v1144, %v1145
        %v1147 = vrot.slane %v1146, 1
        %v1148 = vmax.f32 %v1146, %v1147
        %v1149 = vsub.f32 %v1141, %v1148
        %v1150 = vmul.f32 %v1149, 1.442695
        %v1151 = vpow.pop %v1150
        %v1152 = vsel %vm540, %v1151, 0.0
        %v1153 = vrot.slane %v1152, 4
        %v1154 = vadd.f32 %v1152, %v1153
        %v1155 = vrot.slane %v1154, 2
        %v1156 = vadd.f32 %v1154, %v1155
        %v1157 = vrot.slane %v1156, 1
        %v1158 = vadd.f32 %v1156, %v1157
        %v1159 = vrcp.pop %v1158
        %v1160 = vmul.f32 %v1151, %v1159
        %1161 = vrot.lane.b32.xlu0 %v527, 80
        %v1162 = vpop.permute.xlu0 %1161
        %v1165 = vsel %vm540, %v1160, 0
        %1167 = vmatprep.subr.mxu0 0.0
        %1168 = vmatpush1.msra.mxu0 0.0
        %1169 = vmatprep.subr.mxu0 0.0
        %1170 = vmatpush1.msra.mxu0 0.0
        %1171 = vmatprep.subr.mxu0 0.0
        %1172 = vmatpush1.msra.mxu0 0.0
        %1173 = vmatprep.subr.mxu0 0.0
        %1174 = vmatpush1.msra.mxu0 0.0
        %1175 = vmatprep.subr.mxu0 0.0
        %1176 = vmatpush1.msra.mxu0 0.0
        %1177 = vmatprep.subr.mxu0 0.0
        %1178 = vmatpush1.msra.mxu0 0.0
        %1179 = vmatprep.subr.mxu0 0.0
        %1180 = vmatpush1.msra.mxu0 0.0
        %1181 = vmatprep.subr.mxu0 0.0
        %1182 = vmatpush1.msra.mxu0 0.0
        %1183 = vmatprep.subr.mxu0 0.0
        %1184 = vmatpush1.msra.mxu0 0.0
        %1185 = vmatprep.subr.mxu0 0.0
        %1186 = vmatpush1.msra.mxu0 0.0
        %1187 = vmatprep.subr.mxu0 0.0
        %1188 = vmatpush1.msra.mxu0 0.0
        %1189 = vmatprep.subr.mxu0 0.0
        %1190 = vmatpush1.msra.mxu0 0.0
        %1191 = vmatprep.subr.mxu0 0.0
        %1192 = vmatpush1.msra.mxu0 0.0
        %1193 = vmatprep.subr.mxu0 0.0
        %1194 = vmatpush1.msra.mxu0 0.0
        %1195 = vmatprep.subr.mxu0 0.0
        %1196 = vmatpush1.msra.mxu0 0.0
        %1197 = vmatprep.subr.mxu0 0.0
        %1198 = vmatpush1.msra.mxu0 %v1162
        %1199 = vmatprep.subr.mxu0 0.0
        %1200 = vmatpush2.msra.mxu0 0.0
        %1201 = vmatprep.subr.mxu0 0.0
        %1202 = vmatpush2.msra.mxu0 0.0
        %1203 = vmatprep.subr.mxu0 0.0
        %1204 = vmatpush2.msra.mxu0 0.0
        %1205 = vmatprep.subr.mxu0 0.0
        %1206 = vmatpush2.msra.mxu0 0.0
        %1207 = vmatprep.subr.mxu0 0.0
        %1208 = vmatpush2.msra.mxu0 0.0
        %1209 = vmatprep.subr.mxu0 0.0
        %1210 = vmatpush2.msra.mxu0 0.0
        %1211 = vmatprep.subr.mxu0 0.0
        %1212 = vmatpush2.msra.mxu0 0.0
        %1213 = vmatprep.subr.mxu0 0.0
        %1214 = vmatpush2.msra.mxu0 0.0
        %1215 = vmatprep.subr.mxu0 0.0
        %1216 = vmatpush2.msra.mxu0 0.0
        %1217 = vmatprep.subr.mxu0 0.0
        %1218 = vmatpush2.msra.mxu0 0.0
        %1219 = vmatprep.subr.mxu0 0.0
        %1220 = vmatpush2.msra.mxu0 0.0
        %1221 = vmatprep.subr.mxu0 0.0
        %1222 = vmatpush2.msra.mxu0 0.0
        %1223 = vmatprep.subr.mxu0 0.0
        %1224 = vmatpush2.msra.mxu0 0.0
        %1225 = vmatprep.subr.mxu0 0.0
        %1226 = vmatpush2.msra.mxu0 0.0
        %1227 = vmatprep.subr.mxu0 0.0
        %1228 = vmatpush2.msra.mxu0 0.0
        %1229 = vmatprep.subr.mxu0 0.0
        %1230 = vmatpush2.msra.mxu0 0.0
        %1231 = vmatprep.mubr.f32.mxu0 0.0
        %1232 = vmatmul.mubr.f32.gmra.mxu0 %v1165
        %v1233 = vpop.f32.mrf.mxu0
        %v1234 = vadd.f32 0.0, %v1233
        %v1235 = vpop.f32.mrf.mxu0
        %1236 = vdwg.mxu0
        %1237 = vrot.lane.b32.xlu0 %v533, 112
        %v1238 = vpop.permute.xlu0 %1237
        %1239 = vrot.lane.b32.xlu0 %v534, 112
        %v1240 = vpop.permute.xlu0 %1239
        %1241 = vrot.lane.b32.xlu0 %v535, 112
        %v1242 = vpop.permute.xlu0 %1241
        %1243 = vrot.lane.b32.xlu0 %v536, 112
        %v1244 = vpop.permute.xlu0 %1243
        %v1246 = vsel %vm540, %v1234, 0
        %v1248 = vsel %vm540, %v1238, 0
        %v1250 = vsel %vm540, %v1240, 0
        %v1252 = vsel %vm540, %v1242, 0
        %v1254 = vsel %vm540, %v1244, 0
        %1256 = vmatprep.subr.mxu0 0.0
        %1257 = vmatpush1.xpose.msra.mxu0 0.0
        %1258 = vmatprep.subr.mxu0 0.0
        %1259 = vmatpush1.xpose.msra.mxu0 0.0
        %1260 = vmatprep.subr.mxu0 0.0
        %1261 = vmatpush1.xpose.msra.mxu0 0.0
        %1262 = vmatprep.subr.mxu0 0.0
        %1263 = vmatpush1.xpose.msra.mxu0 0.0
        %1264 = vmatprep.subr.mxu0 0.0
        %1265 = vmatpush1.xpose.msra.mxu0 0.0
        %1266 = vmatprep.subr.mxu0 0.0
        %1267 = vmatpush1.xpose.msra.mxu0 0.0
        %1268 = vmatprep.subr.mxu0 0.0
        %1269 = vmatpush1.xpose.msra.mxu0 0.0
        %1270 = vmatprep.subr.mxu0 0.0
        %1271 = vmatpush1.xpose.msra.mxu0 0.0
        %1272 = vmatprep.subr.mxu0 0.0
        %1273 = vmatpush1.xpose.msra.mxu0 0.0
        %1274 = vmatprep.subr.mxu0 0.0
        %1275 = vmatpush1.xpose.msra.mxu0 0.0
        %1276 = vmatprep.subr.mxu0 0.0
        %1277 = vmatpush1.xpose.msra.mxu0 0.0
        %1278 = vmatprep.subr.mxu0 0.0
        %1279 = vmatpush1.xpose.msra.mxu0 0.0
        %1280 = vmatprep.subr.mxu0 0.0
        %1281 = vmatpush1.xpose.msra.mxu0 %v1254
        %1282 = vmatprep.subr.mxu0 0.0
        %1283 = vmatpush1.xpose.msra.mxu0 %v1252
        %1284 = vmatprep.subr.mxu0 0.0
        %1285 = vmatpush1.xpose.msra.mxu0 %v1250
        %1286 = vmatprep.subr.mxu0 0.0
        %1287 = vmatpush1.xpose.msra.mxu0 %v1248
        %1288 = vmatprep.subr.mxu0 0.0
        %1289 = vmatpush2.xpose.msra.mxu0 0.0
        %1290 = vmatprep.subr.mxu0 0.0
        %1291 = vmatpush2.xpose.msra.mxu0 0.0
        %1292 = vmatprep.subr.mxu0 0.0
        %1293 = vmatpush2.xpose.msra.mxu0 0.0
        %1294 = vmatprep.subr.mxu0 0.0
        %1295 = vmatpush2.xpose.msra.mxu0 0.0
        %1296 = vmatprep.subr.mxu0 0.0
        %1297 = vmatpush2.xpose.msra.mxu0 0.0
        %1298 = vmatprep.subr.mxu0 0.0
        %1299 = vmatpush2.xpose.msra.mxu0 0.0
        %1300 = vmatprep.subr.mxu0 0.0
        %1301 = vmatpush2.xpose.msra.mxu0 0.0
        %1302 = vmatprep.subr.mxu0 0.0
        %1303 = vmatpush2.xpose.msra.mxu0 0.0
        %1304 = vmatprep.subr.mxu0 0.0
        %1305 = vmatpush2.xpose.msra.mxu0 0.0
        %1306 = vmatprep.subr.mxu0 0.0
        %1307 = vmatpush2.xpose.msra.mxu0 0.0
        %1308 = vmatprep.subr.mxu0 0.0
        %1309 = vmatpush2.xpose.msra.mxu0 0.0
        %1310 = vmatprep.subr.mxu0 0.0
        %1311 = vmatpush2.xpose.msra.mxu0 0.0
        %1312 = vmatprep.subr.mxu0 0.0
        %1313 = vmatpush2.xpose.msra.mxu0 0.0
        %1314 = vmatprep.subr.mxu0 0.0
        %1315 = vmatpush2.xpose.msra.mxu0 0.0
        %1316 = vmatprep.subr.mxu0 0.0
        %1317 = vmatpush2.xpose.msra.mxu0 0.0
        %1318 = vmatprep.subr.mxu0 0.0
        %1319 = vmatpush2.xpose.msra.mxu0 0.0
        %1320 = vmatprep.mubr.f32.mxu0 0.0
        %1321 = vmatmul.mubr.f32.gmra.mxu0 %v1246
        %v1322 = vpop.f32.mrf.mxu0
        %v1323 = vadd.f32 0.0, %v1322
        %v1324 = vpop.f32.mrf.mxu0
        %1325 = vdwg.mxu0
        %v1326 = vadd.f32 %v1060, %v1323
        %1327 = vrot.lane.b32.xlu0 %v530, 104
        %v1328 = vpop.permute.xlu0 %1327
        %1329 = vrot.lane.b32.xlu0 %v527, 104
        %v1330 = vpop.permute.xlu0 %1329
        %v1331 = vsel %vm540, %v1328, 0
        %v1333 = vsel %vm540, %v1330, 0
        %1335 = vmatprep.subr.mxu0 0.0
        %1336 = vmatpush1.xpose.msra.mxu0 0.0
        %1337 = vmatprep.subr.mxu0 0.0
        %1338 = vmatpush1.xpose.msra.mxu0 0.0
        %1339 = vmatprep.subr.mxu0 0.0
        %1340 = vmatpush1.xpose.msra.mxu0 0.0
        %1341 = vmatprep.subr.mxu0 0.0
        %1342 = vmatpush1.xpose.msra.mxu0 0.0
        %1343 = vmatprep.subr.mxu0 0.0
        %1344 = vmatpush1.xpose.msra.mxu0 0.0
        %1345 = vmatprep.subr.mxu0 0.0
        %1346 = vmatpush1.xpose.msra.mxu0 0.0
        %1347 = vmatprep.subr.mxu0 0.0
        %1348 = vmatpush1.xpose.msra.mxu0 0.0
        %1349 = vmatprep.subr.mxu0 0.0
        %1350 = vmatpush1.xpose.msra.mxu0 0.0
        %1351 = vmatprep.subr.mxu0 0.0
        %1352 = vmatpush1.xpose.msra.mxu0 0.0
        %1353 = vmatprep.subr.mxu0 0.0
        %1354 = vmatpush1.xpose.msra.mxu0 0.0
        %1355 = vmatprep.subr.mxu0 0.0
        %1356 = vmatpush1.xpose.msra.mxu0 0.0
        %1357 = vmatprep.subr.mxu0 0.0
        %1358 = vmatpush1.xpose.msra.mxu0 0.0
        %1359 = vmatprep.subr.mxu0 0.0
        %1360 = vmatpush1.xpose.msra.mxu0 0.0
        %1361 = vmatprep.subr.mxu0 0.0
        %1362 = vmatpush1.xpose.msra.mxu0 0.0
        %1363 = vmatprep.subr.mxu0 0.0
        %1364 = vmatpush1.xpose.msra.mxu0 0.0
        %1365 = vmatprep.subr.mxu0 0.0
        %1366 = vmatpush1.xpose.msra.mxu0 %v1333
        %1367 = vmatprep.subr.mxu0 0.0
        %1368 = vmatpush2.xpose.msra.mxu0 0.0
        %1369 = vmatprep.subr.mxu0 0.0
        %1370 = vmatpush2.xpose.msra.mxu0 0.0
        %1371 = vmatprep.subr.mxu0 0.0
        %1372 = vmatpush2.xpose.msra.mxu0 0.0
        %1373 = vmatprep.subr.mxu0 0.0
        %1374 = vmatpush2.xpose.msra.mxu0 0.0
        %1375 = vmatprep.subr.mxu0 0.0
        %1376 = vmatpush2.xpose.msra.mxu0 0.0
        %1377 = vmatprep.subr.mxu0 0.0
        %1378 = vmatpush2.xpose.msra.mxu0 0.0
        %1379 = vmatprep.subr.mxu0 0.0
        %1380 = vmatpush2.xpose.msra.mxu0 0.0
        %1381 = vmatprep.subr.mxu0 0.0
        %1382 = vmatpush2.xpose.msra.mxu0 0.0
        %1383 = vmatprep.subr.mxu0 0.0
        %1384 = vmatpush2.xpose.msra.mxu0 0.0
        %1385 = vmatprep.subr.mxu0 0.0
        %1386 = vmatpush2.xpose.msra.mxu0 0.0
        %1387 = vmatprep.subr.mxu0 0.0
        %1388 = vmatpush2.xpose.msra.mxu0 0.0
        %1389 = vmatprep.subr.mxu0 0.0
        %1390 = vmatpush2.xpose.msra.mxu0 0.0
        %1391 = vmatprep.subr.mxu0 0.0
        %1392 = vmatpush2.xpose.msra.mxu0 0.0
        %1393 = vmatprep.subr.mxu0 0.0
        %1394 = vmatpush2.xpose.msra.mxu0 0.0
        %1395 = vmatprep.subr.mxu0 0.0
        %1396 = vmatpush2.xpose.msra.mxu0 0.0
        %1397 = vmatprep.subr.mxu0 0.0
        %1398 = vmatpush2.xpose.msra.mxu0 0.0
        %1399 = vmatprep.mubr.f32.mxu0 0.0
        %1400 = vmatmul.mubr.f32.gmra.mxu0 %v1331
        %v1401 = vpop.f32.mrf.mxu0
        %v1402 = vadd.f32 0.0, %v1401
        %v1403 = vpop.f32.mrf.mxu0
        %1404 = vdwg.mxu0
        %v1405 = vsel %vm618, %v1402, -1000000.0
        %v1406 = vsel %vm540, %v1405, -inf
        %v1407 = vrot.slane %v1406, 4
        %v1408 = vmax.f32 %v1406, %v1407
        %v1409 = vrot.slane %v1408, 2
        %v1410 = vmax.f32 %v1408, %v1409
        %v1411 = vrot.slane %v1410, 1
        %v1412 = vmax.f32 %v1410, %v1411
        %v1413 = vsub.f32 %v1405, %v1412
        %v1414 = vmul.f32 %v1413, 1.442695
        %v1415 = vpow.pop %v1414
        %v1416 = vsel %vm540, %v1415, 0.0
        %v1417 = vrot.slane %v1416, 4
        %v1418 = vadd.f32 %v1416, %v1417
        %v1419 = vrot.slane %v1418, 2
        %v1420 = vadd.f32 %v1418, %v1419
        %v1421 = vrot.slane %v1420, 1
        %v1422 = vadd.f32 %v1420, %v1421
        %v1423 = vrcp.pop %v1422
        %v1424 = vmul.f32 %v1415, %v1423
        %1425 = vrot.lane.b32.xlu0 %v527, 72
        %v1426 = vpop.permute.xlu0 %1425
        %v1429 = vsel %vm540, %v1424, 0
        %1431 = vmatprep.subr.mxu0 0.0
        %1432 = vmatpush1.msra.mxu0 0.0
        %1433 = vmatprep.subr.mxu0 0.0
        %1434 = vmatpush1.msra.mxu0 0.0
        %1435 = vmatprep.subr.mxu0 0.0
        %1436 = vmatpush1.msra.mxu0 0.0
        %1437 = vmatprep.subr.mxu0 0.0
        %1438 = vmatpush1.msra.mxu0 0.0
        %1439 = vmatprep.subr.mxu0 0.0
        %1440 = vmatpush1.msra.mxu0 0.0
        %1441 = vmatprep.subr.mxu0 0.0
        %1442 = vmatpush1.msra.mxu0 0.0
        %1443 = vmatprep.subr.mxu0 0.0
        %1444 = vmatpush1.msra.mxu0 0.0
        %1445 = vmatprep.subr.mxu0 0.0
        %1446 = vmatpush1.msra.mxu0 0.0
        %1447 = vmatprep.subr.mxu0 0.0
        %1448 = vmatpush1.msra.mxu0 0.0
        %1449 = vmatprep.subr.mxu0 0.0
        %1450 = vmatpush1.msra.mxu0 0.0
        %1451 = vmatprep.subr.mxu0 0.0
        %1452 = vmatpush1.msra.mxu0 0.0
        %1453 = vmatprep.subr.mxu0 0.0
        %1454 = vmatpush1.msra.mxu0 0.0
        %1455 = vmatprep.subr.mxu0 0.0
        %1456 = vmatpush1.msra.mxu0 0.0
        %1457 = vmatprep.subr.mxu0 0.0
        %1458 = vmatpush1.msra.mxu0 0.0
        %1459 = vmatprep.subr.mxu0 0.0
        %1460 = vmatpush1.msra.mxu0 0.0
        %1461 = vmatprep.subr.mxu0 0.0
        %1462 = vmatpush1.msra.mxu0 %v1426
        %1463 = vmatprep.subr.mxu0 0.0
        %1464 = vmatpush2.msra.mxu0 0.0
        %1465 = vmatprep.subr.mxu0 0.0
        %1466 = vmatpush2.msra.mxu0 0.0
        %1467 = vmatprep.subr.mxu0 0.0
        %1468 = vmatpush2.msra.mxu0 0.0
        %1469 = vmatprep.subr.mxu0 0.0
        %1470 = vmatpush2.msra.mxu0 0.0
        %1471 = vmatprep.subr.mxu0 0.0
        %1472 = vmatpush2.msra.mxu0 0.0
        %1473 = vmatprep.subr.mxu0 0.0
        %1474 = vmatpush2.msra.mxu0 0.0
        %1475 = vmatprep.subr.mxu0 0.0
        %1476 = vmatpush2.msra.mxu0 0.0
        %1477 = vmatprep.subr.mxu0 0.0
        %1478 = vmatpush2.msra.mxu0 0.0
        %1479 = vmatprep.subr.mxu0 0.0
        %1480 = vmatpush2.msra.mxu0 0.0
        %1481 = vmatprep.subr.mxu0 0.0
        %1482 = vmatpush2.msra.mxu0 0.0
        %1483 = vmatprep.subr.mxu0 0.0
        %1484 = vmatpush2.msra.mxu0 0.0
        %1485 = vmatprep.subr.mxu0 0.0
        %1486 = vmatpush2.msra.mxu0 0.0
        %1487 = vmatprep.subr.mxu0 0.0
        %1488 = vmatpush2.msra.mxu0 0.0
        %1489 = vmatprep.subr.mxu0 0.0
        %1490 = vmatpush2.msra.mxu0 0.0
        %1491 = vmatprep.subr.mxu0 0.0
        %1492 = vmatpush2.msra.mxu0 0.0
        %1493 = vmatprep.subr.mxu0 0.0
        %1494 = vmatpush2.msra.mxu0 0.0
        %1495 = vmatprep.mubr.f32.mxu0 0.0
        %1496 = vmatmul.mubr.f32.gmra.mxu0 %v1429
        %v1497 = vpop.f32.mrf.mxu0
        %v1498 = vadd.f32 0.0, %v1497
        %v1499 = vpop.f32.mrf.mxu0
        %1500 = vdwg.mxu0
        %1501 = vrot.lane.b32.xlu0 %v533, 104
        %v1502 = vpop.permute.xlu0 %1501
        %1503 = vrot.lane.b32.xlu0 %v534, 104
        %v1504 = vpop.permute.xlu0 %1503
        %1505 = vrot.lane.b32.xlu0 %v535, 104
        %v1506 = vpop.permute.xlu0 %1505
        %1507 = vrot.lane.b32.xlu0 %v536, 104
        %v1508 = vpop.permute.xlu0 %1507
        %v1510 = vsel %vm540, %v1498, 0
        %v1512 = vsel %vm540, %v1502, 0
        %v1514 = vsel %vm540, %v1504, 0
        %v1516 = vsel %vm540, %v1506, 0
        %v1518 = vsel %vm540, %v1508, 0
        %1520 = vmatprep.subr.mxu0 0.0
        %1521 = vmatpush1.xpose.msra.mxu0 0.0
        %1522 = vmatprep.subr.mxu0 0.0
        %1523 = vmatpush1.xpose.msra.mxu0 0.0
        %1524 = vmatprep.subr.mxu0 0.0
        %1525 = vmatpush1.xpose.msra.mxu0 0.0
        %1526 = vmatprep.subr.mxu0 0.0
        %1527 = vmatpush1.xpose.msra.mxu0 0.0
        %1528 = vmatprep.subr.mxu0 0.0
        %1529 = vmatpush1.xpose.msra.mxu0 0.0
        %1530 = vmatprep.subr.mxu0 0.0
        %1531 = vmatpush1.xpose.msra.mxu0 0.0
        %1532 = vmatprep.subr.mxu0 0.0
        %1533 = vmatpush1.xpose.msra.mxu0 0.0
        %1534 = vmatprep.subr.mxu0 0.0
        %1535 = vmatpush1.xpose.msra.mxu0 0.0
        %1536 = vmatprep.subr.mxu0 0.0
        %1537 = vmatpush1.xpose.msra.mxu0 0.0
        %1538 = vmatprep.subr.mxu0 0.0
        %1539 = vmatpush1.xpose.msra.mxu0 0.0
        %1540 = vmatprep.subr.mxu0 0.0
        %1541 = vmatpush1.xpose.msra.mxu0 0.0
        %1542 = vmatprep.subr.mxu0 0.0
        %1543 = vmatpush1.xpose.msra.mxu0 0.0
        %1544 = vmatprep.subr.mxu0 0.0
        %1545 = vmatpush1.xpose.msra.mxu0 %v1518
        %1546 = vmatprep.subr.mxu0 0.0
        %1547 = vmatpush1.xpose.msra.mxu0 %v1516
        %1548 = vmatprep.subr.mxu0 0.0
        %1549 = vmatpush1.xpose.msra.mxu0 %v1514
        %1550 = vmatprep.subr.mxu0 0.0
        %1551 = vmatpush1.xpose.msra.mxu0 %v1512
        %1552 = vmatprep.subr.mxu0 0.0
        %1553 = vmatpush2.xpose.msra.mxu0 0.0
        %1554 = vmatprep.subr.mxu0 0.0
        %1555 = vmatpush2.xpose.msra.mxu0 0.0
        %1556 = vmatprep.subr.mxu0 0.0
        %1557 = vmatpush2.xpose.msra.mxu0 0.0
        %1558 = vmatprep.subr.mxu0 0.0
        %1559 = vmatpush2.xpose.msra.mxu0 0.0
        %1560 = vmatprep.subr.mxu0 0.0
        %1561 = vmatpush2.xpose.msra.mxu0 0.0
        %1562 = vmatprep.subr.mxu0 0.0
        %1563 = vmatpush2.xpose.msra.mxu0 0.0
        %1564 = vmatprep.subr.mxu0 0.0
        %1565 = vmatpush2.xpose.msra.mxu0 0.0
        %1566 = vmatprep.subr.mxu0 0.0
        %1567 = vmatpush2.xpose.msra.mxu0 0.0
        %1568 = vmatprep.subr.mxu0 0.0
        %1569 = vmatpush2.xpose.msra.mxu0 0.0
        %1570 = vmatprep.subr.mxu0 0.0
        %1571 = vmatpush2.xpose.msra.mxu0 0.0
        %1572 = vmatprep.subr.mxu0 0.0
        %1573 = vmatpush2.xpose.msra.mxu0 0.0
        %1574 = vmatprep.subr.mxu0 0.0
        %1575 = vmatpush2.xpose.msra.mxu0 0.0
        %1576 = vmatprep.subr.mxu0 0.0
        %1577 = vmatpush2.xpose.msra.mxu0 0.0
        %1578 = vmatprep.subr.mxu0 0.0
        %1579 = vmatpush2.xpose.msra.mxu0 0.0
        %1580 = vmatprep.subr.mxu0 0.0
        %1581 = vmatpush2.xpose.msra.mxu0 0.0
        %1582 = vmatprep.subr.mxu0 0.0
        %1583 = vmatpush2.xpose.msra.mxu0 0.0
        %1584 = vmatprep.mubr.f32.mxu0 0.0
        %1585 = vmatmul.mubr.f32.gmra.mxu0 %v1510
        %v1586 = vpop.f32.mrf.mxu0
        %v1587 = vadd.f32 0.0, %v1586
        %v1588 = vpop.f32.mrf.mxu0
        %1589 = vdwg.mxu0
        %v1590 = vadd.f32 %v1326, %v1587
        %1591 = vrot.lane.b32.xlu0 %v812, 8
        %v1592 = vpop.permute.xlu0 %1591
        %1594 = vrot.lane.b32.xlu0 %v1160, 16
        %v1595 = vpop.permute.xlu0 %1594
        %1597 = vrot.lane.b32.xlu0 %v1424, 24
        %v1598 = vpop.permute.xlu0 %1597
        %v1600 = vsel %vm540, %v638, %v1592
        %v1601 = vsel %vm333, %v1600, %v1595
        %vm1602 = vcmask 195584
        %v1603 = vsel %vm1602, %v1601, %v1598
        %1604 = vst.msk [vmem:[%s313] sm:$0xff] %vm432, %v1603
        %1605 = vst.msk [vmem:[%s306] sm:$0xff] %vm432, %v1590
        %s1606 = sand.u32 %s181, 1
        %s1607 = scalar_lea.sflag [#allocation5], %s1606
        %s1608 = sand.u32 %s181, 1
        %s1609 = smul.addr %s1608, 8
        %s1610 = scalar_lea.vmem [#allocation4], %s1609
        %s1611 = sand.u32 %s207, 1
        %s1612 = scalar_lea.sflag [#allocation7], %s1611
        %s1613 = sand.u32 %s207, 1
        %s1614 = smul.addr %s1613, 8
        %s1615 = scalar_lea.vmem [#allocation6], %s1614
        // Predicated region
        $region45: #{tpu_custom_call.1} parent=43 // pred_check
          %p1616 = pneg %p191
        $region46: #{tpu_custom_call.1} parent=43 // pred_check_branch
          %1618 = sbr.rel (%p1616) target = $region48
        $region47: #{tpu_custom_call.1} parent=43 // pred_region
          %s1620 = ssub.s32 128, 128
          %1621 = vsyncadd %s1607, %s1620
          %s1622 = smul.addr %s32, 128
          %s1623 = scalar_lea.hbm %s7, %s1622
          %s1625 = sshll.u32 %s1610, 4
          %s1626 = int_to_ptr.vmem [resolvable:$true] %s1625
          %1628 = dma.vmem_to_hbm [thread:$0]  %s1626, 128, %s1623, %s1607
        $region48: #{tpu_custom_call.1} parent=43 // pred_fallthru
          _
        // Predicated region
        $region49: #{tpu_custom_call.1} parent=43 // pred_check
          %p1629 = pneg %p217
        $region50: #{tpu_custom_call.1} parent=43 // pred_check_branch
          %1631 = sbr.rel (%p1629) target = $region52
        $region51: #{tpu_custom_call.1} parent=43 // pred_region
          %s1633 = ssub.s32 128, 128
          %1634 = vsyncadd %s1612, %s1633
          %s1635 = smul.addr %s32, 128
          %s1636 = scalar_lea.hbm %s8, %s1635
          %s1638 = sshll.u32 %s1615, 4
          %s1639 = int_to_ptr.vmem [resolvable:$true] %s1638
          %1641 = dma.vmem_to_hbm [thread:$0]  %s1639, 128, %s1636, %s1612
        $region52: #{tpu_custom_call.1} parent=43 // pred_fallthru
          _
      $region44: #{tpu_custom_call.1} parent=5 // pred_fallthru
        _
      %p1642 = scmp.le.s32.totalorder 2, %s27
      // Predicated region
      $region53: #{tpu_custom_call.1} parent=5 // pred_check
        %p1643 = pneg %p1642
      $region54: #{tpu_custom_call.1} parent=5 // pred_check_branch
        %1645 = sbr.rel (%p1643) target = $region56
      $region55: #{tpu_custom_call.1} parent=5 // pred_region
        %s1646 = ssub.s32 %s27, 2
        // Predicated region
        $region57: #{tpu_custom_call.1} parent=55 // pred_check
          %p1647 = pneg %p197
        $region58: #{tpu_custom_call.1} parent=55 // pred_check_branch
          %1649 = sbr.rel (%p1647) target = $region60
        $region59: #{tpu_custom_call.1} parent=55 // pred_region
          %s1650 = sand.u32 %s182, 1
          %s1651 = scalar_lea.sflag [#allocation5], %s1650
          %s1652 = sand.u32 %s182, 1
          %s1653 = smul.addr %s1652, 8
          %s1654 = scalar_lea.vmem [#allocation4], %s1653
          %1655 = dma.done %s1651, 128
        $region60: #{tpu_custom_call.1} parent=55 // pred_fallthru
          _
        // Predicated region
        $region61: #{tpu_custom_call.1} parent=55 // pred_check
          %p1656 = pneg %p223
        $region62: #{tpu_custom_call.1} parent=55 // pred_check_branch
          %1658 = sbr.rel (%p1656) target = $region64
        $region63: #{tpu_custom_call.1} parent=55 // pred_region
          %s1659 = sand.u32 %s208, 1
          %s1660 = scalar_lea.sflag [#allocation7], %s1659
          %s1661 = sand.u32 %s208, 1
          %s1662 = smul.addr %s1661, 8
          %s1663 = scalar_lea.vmem [#allocation6], %s1662
          %1664 = dma.done %s1660, 128
        $region64: #{tpu_custom_call.1} parent=55 // pred_fallthru
          _
      $region56: #{tpu_custom_call.1} parent=5 // pred_fallthru
        _
    $region6: #{tpu_custom_call.1} parent=1 // loop_footer
      %s31 = sadd.s32 1, %s27
    $region7: #{tpu_custom_call.1} parent=1 // loop_footer_branch
      %26 = sbr.rel target = $region3
    $region8: #{tpu_custom_call.1} parent=1 // loop_exit
      _
    %1665 = vsyncpa [#allocation5], 1
    %s1666 = scalar_lea.sflag [#allocation5], 1
    %1667 = vsyncpa %s1666, 1
    %1668 = vsyncpa [#allocation7], 1
    %s1669 = scalar_lea.sflag [#allocation7], 1
    %1670 = vsyncpa %s1669, 1

</llo_original>
